<compile_context>
chip_gen: v5e
topology: v5e:2x2
jax: 0.10.0
libtpu: 0.0.40
codegen_flags: <defaults>
</compile_context>

<pallas_src>
import functools

import jax
import jax.numpy as jnp
from jax.experimental import pallas as pl
from jax.experimental.pallas import tpu as pltpu


# ---------------------------------------------------------------------------
# Fused kernel: noise-schedule + mixing + conditioning + net + MSE partials
# ---------------------------------------------------------------------------
def _rf_fused_kernel(times_ref, data_ref, noise_ref, timew_ref, lemb_ref,
                     w_ref, b_ref, out_ref, *, tn):
    j = pl.program_id(0)

    # cosmap(t) = 1 - 1/(tan(pi/2 t)+1), written with sin/cos for TPU lowering.
    # (B,1) trig per step is negligible; keeping it in-body keeps the grid axis
    # free of loop-carried state so it can be megacore-parallel.
    t = times_ref[...]                                    # (B,1) f32
    a = (jnp.pi / 2.0) * t
    tm = 1.0 - jnp.cos(a) / (jnp.sin(a) + jnp.cos(a))     # (B,1) f32

    # Conditioned net input h: lives only in VMEM/vregs, never written to HBM.
    d = data_ref[...]                                     # (B,D) f32 (resident)
    n = noise_ref[...]                                    # (B,D) f32 (resident)
    tw = timew_ref[...].astype(jnp.float32)               # (1,D)  bf16 -> f32
    le = lemb_ref[...].astype(jnp.float32)                # (B,D)  bf16 -> f32
    #   tm*d + (1-tm)*n + tm*tw + le  ==  tm*(d - n + tw) + n + le
    h = tm * (d - n + tw) + n + le
    h_bf = h.astype(jnp.bfloat16)

    # Synthetic net column tile: bf16 x bf16 -> f32 accumulation on the MXU.
    pred = jnp.dot(h_bf, w_ref[...], preferred_element_type=jnp.float32)
    pred = pred + b_ref[...]                              # (B,tn) + (1,tn)

    # MSE target tile, sliced from the resident blocks (flow never hits HBM).
    start = pl.multiple_of(j * tn, 128)
    flow = data_ref[:, pl.ds(start, tn)] - noise_ref[:, pl.ds(start, tn)]

    # Per-tile partial squared error -> disjoint (1,128) output block (lane 0).
    diff = flow - pred
    partial = jnp.sum(diff * diff)
    lane = jax.lax.broadcasted_iota(jnp.int32, (1, 128), 1)
    out_ref[...] = jnp.where(lane == 0, partial, jnp.float32(0.0))


def _pick_tile_n(B, D, N, *, tn_max=512, vmem_budget_bytes=40 * 1024 * 1024):
    """Largest output-column tile (multiple of 128, divides N) fitting the budget."""
    assert N % 128 == 0, "net output dim must be a multiple of 128"
    assert tn_max % 128 == 0
    # Resident inputs, counted double-buffered (pessimistic):
    #   data f32 + noise f32 + label_emb bf16 + time_w bf16 + times f32
    resident = 2 * (B * D * 4 + B * D * 4 + B * D * 2 + D * 2 + B * 4)
    for cand in range(min(tn_max, N), 0, -128):
        if N % cand:
            continue
        streamed = 2 * (D * cand * 2 + cand * 4) + 2 * 128 * 4   # W, b, out tiles
        if resident + streamed <= vmem_budget_bytes:
            return cand, resident + streamed
    raise ValueError("no output tile fits the VMEM budget; stream data/noise "
                     "as column tiles for shapes this large")


# ---------------------------------------------------------------------------
# Wrapper: one pallas_call + a tiny scalar reduce
# ---------------------------------------------------------------------------
def rectified_flow_loss(data, noise, times, w_bf16, b, time_w_bf16, lemb_bf16,
                        *, tn_max=512):
    B, D = data.shape
    Dw, N = w_bf16.shape
    assert Dw == D
    # flow is tiled with the net-output column index, which assumes N == D
    # (true for the synthetic square net standing in for self.net).
    assert N == D, "fused flow tiling requires net output dim == input dim"

    tn, vmem_needed = _pick_tile_n(B, D, N, tn_max=tn_max)
    num_tiles = N // tn
    vmem_limit = int(min(max(vmem_needed * 5 // 4 + (2 << 20), 16 << 20), 56 << 20))

    t2d = times.reshape(B, 1).astype(jnp.float32)

    partials = pl.pallas_call(
        functools.partial(_rf_fused_kernel, tn=tn),
        out_shape=jax.ShapeDtypeStruct((1, num_tiles * 128), jnp.float32),
        grid_spec=pltpu.PrefetchScalarGridSpec(
            num_scalar_prefetch=0,
            grid=(num_tiles,),
            in_specs=[
                pl.BlockSpec((B, 1), lambda j: (0, 0)),    # times       (resident)
                pl.BlockSpec((B, D), lambda j: (0, 0)),    # data  f32   (resident)
                pl.BlockSpec((B, D), lambda j: (0, 0)),    # noise f32   (resident)
                pl.BlockSpec((1, D), lambda j: (0, 0)),    # time_w bf16 (resident)
                pl.BlockSpec((B, D), lambda j: (0, 0)),    # label_emb[y] bf16 (resident)
                pl.BlockSpec((D, tn), lambda j: (0, j)),   # W bf16, streamed exactly once
                pl.BlockSpec((1, tn), lambda j: (0, j)),   # bias f32
            ],
            out_specs=pl.BlockSpec((1, 128), lambda j: (0, j)),
        ),
        compiler_params=pltpu.CompilerParams(
            dimension_semantics=("parallel",),             # v7x: 2 TCs split the W stream
            vmem_limit_bytes=vmem_limit,
        ),
    )(t2d, data, noise, time_w_bf16, lemb_bf16, w_bf16, b)

    return jnp.sum(partials) / jnp.float32(B * N)


# ---------------------------------------------------------------------------
# RectifiedFlow.forward
# ---------------------------------------------------------------------------
def rectified_flow_forward(data_nchw, labels, noise_nchw, times,
                           W, b, time_w, label_emb):
    B = data_nchw.shape[0]
    D = data_nchw.size // B
    data = data_nchw.reshape(B, D).astype(jnp.float32)
    noise = noise_nchw.reshape(B, D).astype(jnp.float32)

    # Tiny gather by XLA, fed to the kernel in bf16 (it only feeds the bf16 h).
    lemb_bf16 = label_emb[labels].astype(jnp.bfloat16)
    time_w_bf16 = time_w.reshape(1, D).astype(jnp.bfloat16)

    w_bf16 = W.astype(jnp.bfloat16)                 # halves the dominant HBM stream
    b_f32 = b.reshape(1, -1).astype(jnp.float32)

    return rectified_flow_loss(data, noise, times, w_bf16, b_f32,
                               time_w_bf16, lemb_bf16)


if __name__ == "__main__":
    B, C, H, Wd = 2, 4, 16, 16
    D = C * H * Wd
    num_classes = 10

    key = jax.random.PRNGKey(0)
    k1, k2, k3, k4, k5, k6, k7, k8 = jax.random.split(key, 8)

    data_nchw = jax.random.normal(k1, (B, C, H, Wd), jnp.float32)
    labels = jax.random.randint(k2, (B,), 0, num_classes)
    noise_nchw = jax.random.normal(k3, (B, C, H, Wd), jnp.float32)   # randn_like(data)
    times = jax.random.uniform(k4, (B,), jnp.float32)                # rand(batch)

    # deterministic synthetic-net parameters
    Wp = jax.random.normal(k5, (D, D), jnp.float32) / jnp.sqrt(jnp.float32(D))
    bp = jax.random.normal(k6, (1, D), jnp.float32) * 0.02
    time_w = jax.random.normal(k7, (D,), jnp.float32) * 0.02
    label_emb = jax.random.normal(k8, (num_classes, D), jnp.float32) * 0.02

    loss = rectified_flow_forward(data_nchw, labels, noise_nchw, times,
                                  Wp, bp, time_w, label_emb)
    loss = jax.block_until_ready(loss)

    # Pure-JAX reference with matching bf16 casts (loose tolerance: bf16 MXU).
    data = data_nchw.reshape(B, D)
    noise = noise_nchw.reshape(B, D)
    t = times.reshape(B, 1)
    tm = 1.0 - 1.0 / (jnp.tan(jnp.pi / 2.0 * t) + 1.0)
    flow = data - noise
    h_ref = (tm * data + (1.0 - tm) * noise
             + tm * time_w.reshape(1, D).astype(jnp.bfloat16).astype(jnp.float32)
             + label_emb[labels].astype(jnp.bfloat16).astype(jnp.float32))
    pred_ref = jnp.dot(h_ref.astype(jnp.bfloat16), Wp.astype(jnp.bfloat16),
                       preferred_element_type=jnp.float32) + bp
    ref = jnp.mean((flow - pred_ref) ** 2)

    assert loss.shape == () and bool(jnp.isfinite(loss))
    assert abs(float(loss) - float(ref)) <= 0.03 * max(1.0, abs(float(ref)))
    print("KERNEL_OK")
</pallas_src>

<mosaic_0001>
module attributes {stable_mosaic.version = 11 : i64} {
  func.func @_rf_fused_kernel(%arg0: i32, %arg1: memref<2x1xf32, #tpu.memory_space<vmem>>, %arg2: memref<2x1024xf32, #tpu.memory_space<vmem>>, %arg3: memref<2x1024xf32, #tpu.memory_space<vmem>>, %arg4: memref<1x1024xbf16, #tpu.memory_space<vmem>>, %arg5: memref<2x1024xbf16, #tpu.memory_space<vmem>>, %arg6: memref<1024x512xbf16, #tpu.memory_space<vmem>>, %arg7: memref<1x512xf32, #tpu.memory_space<vmem>>, %arg8: memref<1x128xf32, #tpu.memory_space<vmem>>) attributes {dimension_semantics = [#tpu.dimension_semantics<parallel>], iteration_bounds = array<i64: 2>, scalar_prefetch = 0 : i64, scratch_operands = 0 : i64, tpu.core_type = #tpu.core_type<tc>, window_params = [{pipeline_mode = #tpu.pipeline_mode<synchronous>, transform_indices = @transform_0, window_bounds = array<i64: 2, 1>}, {pipeline_mode = #tpu.pipeline_mode<synchronous>, transform_indices = @transform_1, window_bounds = array<i64: 2, 1024>}, {pipeline_mode = #tpu.pipeline_mode<synchronous>, transform_indices = @transform_2, window_bounds = array<i64: 2, 1024>}, {pipeline_mode = #tpu.pipeline_mode<synchronous>, transform_indices = @transform_3, window_bounds = array<i64: 1, 1024>}, {pipeline_mode = #tpu.pipeline_mode<synchronous>, transform_indices = @transform_4, window_bounds = array<i64: 2, 1024>}, {transform_indices = @transform_5, window_bounds = array<i64: 1024, 512>}, {transform_indices = @transform_6, window_bounds = array<i64: 1, 512>}, {transform_indices = @transform_7, window_bounds = array<i64: 1, 128>}]} {
    %c0 = arith.constant 0 : index
    %c0_0 = arith.constant 0 : index
    %0 = vector.load %arg1[%c0, %c0_0] : memref<2x1xf32, #tpu.memory_space<vmem>>, vector<2x1xf32>
    %cst = arith.constant 1.57079637 : f32
    %1 = vector.broadcast %cst : f32 to vector<2x1xf32>
    %2 = arith.mulf %1, %0 : vector<2x1xf32>
    %3 = math.cos %2 : vector<2x1xf32>
    %4 = math.sin %2 : vector<2x1xf32>
    %5 = math.cos %2 : vector<2x1xf32>
    %6 = arith.addf %4, %5 : vector<2x1xf32>
    %7 = arith.divf %3, %6 : vector<2x1xf32>
    %cst_1 = arith.constant 1.000000e+00 : f32
    %8 = vector.broadcast %cst_1 : f32 to vector<2x1xf32>
    %9 = arith.subf %8, %7 : vector<2x1xf32>
    %c0_2 = arith.constant 0 : index
    %c0_3 = arith.constant 0 : index
    %10 = vector.load %arg2[%c0_2, %c0_3] : memref<2x1024xf32, #tpu.memory_space<vmem>>, vector<2x1024xf32>
    %c0_4 = arith.constant 0 : index
    %c0_5 = arith.constant 0 : index
    %11 = vector.load %arg3[%c0_4, %c0_5] : memref<2x1024xf32, #tpu.memory_space<vmem>>, vector<2x1024xf32>
    %c0_6 = arith.constant 0 : index
    %c0_7 = arith.constant 0 : index
    %12 = vector.load %arg4[%c0_6, %c0_7] : memref<1x1024xbf16, #tpu.memory_space<vmem>>, vector<1x1024xbf16>
    %13 = arith.extf %12 : vector<1x1024xbf16> to vector<1x1024xf32>
    %c0_8 = arith.constant 0 : index
    %c0_9 = arith.constant 0 : index
    %14 = vector.load %arg5[%c0_8, %c0_9] : memref<2x1024xbf16, #tpu.memory_space<vmem>>, vector<2x1024xbf16>
    %15 = arith.extf %14 : vector<2x1024xbf16> to vector<2x1024xf32>
    %16 = arith.subf %10, %11 : vector<2x1024xf32>
    %17 = vector.broadcast %13 : vector<1x1024xf32> to vector<2x1024xf32>
    %18 = arith.addf %16, %17 : vector<2x1024xf32>
    %19 = vector.broadcast %9 : vector<2x1xf32> to vector<2x1024xf32>
    %20 = arith.mulf %19, %18 : vector<2x1024xf32>
    %21 = arith.addf %20, %11 : vector<2x1024xf32>
    %22 = arith.addf %21, %15 : vector<2x1024xf32>
    %23 = arith.truncf %22 : vector<2x1024xf32> to vector<2x1024xbf16>
    %c0_10 = arith.constant 0 : index
    %c0_11 = arith.constant 0 : index
    %24 = vector.load %arg6[%c0_10, %c0_11] : memref<1024x512xbf16, #tpu.memory_space<vmem>>, vector<1024x512xbf16>
    %cst_12 = arith.constant dense<0.000000e+00> : vector<2x512xf32>
    %25 = tpu.matmul %23, %24, %cst_12 {dimension_numbers = #tpu.dot_dimension_numbers<[1], [0], [0], [1], [0, 0, 1, 1], [], []>} : vector<2x1024xbf16>, vector<1024x512xbf16>, vector<2x512xf32> -> vector<2x512xf32>
    %c0_13 = arith.constant 0 : index
    %c0_14 = arith.constant 0 : index
    %26 = vector.load %arg7[%c0_13, %c0_14] : memref<1x512xf32, #tpu.memory_space<vmem>>, vector<1x512xf32>
    %27 = vector.broadcast %26 : vector<1x512xf32> to vector<2x512xf32>
    %28 = arith.addf %25, %27 : vector<2x512xf32>
    %c512_i32 = arith.constant 512 : i32
    %29 = arith.muli %arg0, %c512_i32 : i32
    %30 = tpu.assume_multiple %29, 128 : i32
    %c0_15 = arith.constant 0 : index
    %31 = arith.index_cast %30 : i32 to index
    %32 = vector.load %arg2[%c0_15, %31] : memref<2x1024xf32, #tpu.memory_space<vmem>>, vector<2x512xf32>
    %c0_16 = arith.constant 0 : index
    %33 = arith.index_cast %30 : i32 to index
    %34 = vector.load %arg3[%c0_16, %33] : memref<2x1024xf32, #tpu.memory_space<vmem>>, vector<2x512xf32>
    %35 = arith.subf %32, %34 : vector<2x512xf32>
    %36 = arith.subf %35, %28 : vector<2x512xf32>
    %37 = arith.mulf %36, %36 : vector<2x512xf32>
    %38 = vector.shape_cast %37 : vector<2x512xf32> to vector<1x2x512xf32>
    %cst_17 = arith.constant dense<0.000000e+00> : vector<1xf32>
    %39 = vector.multi_reduction <add>, %38, %cst_17 [1, 2] : vector<1x2x512xf32> to vector<1xf32>
    %40 = vector.shape_cast %39 : vector<1xf32> to vector<1x1x1xf32>
    %41 = vector.extract %40[0, 0, 0] : f32 from vector<1x1x1xf32>
    %42 = tpu.iota {dimensions = array<i32: 1>} : vector<1x128xi32>
    %c0_i32 = arith.constant 0 : i32
    %43 = vector.broadcast %c0_i32 : i32 to vector<1x128xi32>
    %44 = arith.cmpi eq, %42, %43 : vector<1x128xi32>
    %cst_18 = arith.constant 0.000000e+00 : f32
    %45 = vector.broadcast %41 : f32 to vector<1x128xf32>
    %46 = vector.broadcast %cst_18 : f32 to vector<1x128xf32>
    %47 = arith.select %44, %45, %46 : vector<1x128xi1>, vector<1x128xf32>
    %c0_19 = arith.constant 0 : index
    %c0_20 = arith.constant 0 : index
    %48 = vector.load %arg8[%c0_19, %c0_20] : memref<1x128xf32, #tpu.memory_space<vmem>>, vector<1x128xf32>
    tpu.vector_store %arg8[%c0_19, %c0_20], %47 {strides = array<i32>} : memref<1x128xf32, #tpu.memory_space<vmem>>, vector<1x128xf32>,
    return
  }
  func.func @transform_0(%arg0: i32) -> (i32, i32) {
    %c0_i32 = arith.constant 0 : i32
    %c0_i32_0 = arith.constant 0 : i32
    %c0_i32_1 = arith.constant 0 : i32
    return %c0_i32, %c0_i32_0 : i32, i32
  }
  func.func @transform_1(%arg0: i32) -> (i32, i32) {
    %c0_i32 = arith.constant 0 : i32
    %c0_i32_0 = arith.constant 0 : i32
    %c0_i32_1 = arith.constant 0 : i32
    return %c0_i32, %c0_i32_0 : i32, i32
  }
  func.func @transform_2(%arg0: i32) -> (i32, i32) {
    %c0_i32 = arith.constant 0 : i32
    %c0_i32_0 = arith.constant 0 : i32
    %c0_i32_1 = arith.constant 0 : i32
    return %c0_i32, %c0_i32_0 : i32, i32
  }
  func.func @transform_3(%arg0: i32) -> (i32, i32) {
    %c0_i32 = arith.constant 0 : i32
    %c0_i32_0 = arith.constant 0 : i32
    %c0_i32_1 = arith.constant 0 : i32
    return %c0_i32, %c0_i32_0 : i32, i32
  }
  func.func @transform_4(%arg0: i32) -> (i32, i32) {
    %c0_i32 = arith.constant 0 : i32
    %c0_i32_0 = arith.constant 0 : i32
    %c0_i32_1 = arith.constant 0 : i32
    return %c0_i32, %c0_i32_0 : i32, i32
  }
  func.func @transform_5(%arg0: i32) -> (i32, i32) {
    %c0_i32 = arith.constant 0 : i32
    %c0_i32_0 = arith.constant 0 : i32
    return %c0_i32, %arg0 : i32, i32
  }
  func.func @transform_6(%arg0: i32) -> (i32, i32) {
    %c0_i32 = arith.constant 0 : i32
    %c0_i32_0 = arith.constant 0 : i32
    return %c0_i32, %arg0 : i32, i32
  }
  func.func @transform_7(%arg0: i32) -> (i32, i32) {
    %c0_i32 = arith.constant 0 : i32
    %c0_i32_0 = arith.constant 0 : i32
    return %c0_i32, %arg0 : i32, i32
  }
}

</mosaic_0001>

<llo_original>
// kernel: tpu_custom_call.1
$region0: #{tpu_custom_call.1}
  #allocation0 [shape = 'u32[]', space=smem, size = 0x4, offset = 0x4, fixed_abs, tag = 'smem constant byte address 0x4 - core index']
  #allocation1 [shape = 'u32[72,128]{1,0:T(1,128)}', space=vmem, size = 0x9000, scoped, tag = 'internal scratch']
  %s0 = inlined_call_operand.vmem [shape: f32[2,1], index: 0, kind: input, shape index: {}]
  %s1 = inlined_call_operand.hbm [shape: f32[2,1024], index: 1, kind: input, shape index: {}]
  %s2 = inlined_call_operand.hbm [shape: f32[2,1024], index: 2, kind: input, shape index: {}]
  %s3 = inlined_call_operand.hbm [shape: bf16[1,1024], index: 3, kind: input, shape index: {}]
  %s4 = inlined_call_operand.hbm [shape: bf16[2,1024], index: 4, kind: input, shape index: {}]
  %s5 = inlined_call_operand.hbm [shape: bf16[1024,1024], index: 5, kind: input, shape index: {}]
  %s6 = inlined_call_operand.hbm [shape: f32[1,1024], index: 6, kind: input, shape index: {}]
  %s7 = inlined_call_operand.hbm [shape: f32[1,256], index: 7, kind: output, shape index: {}]
  %s8 = sld [smem:[#allocation0]]
  $region85: #{tpu_custom_call.1} parent=0
    _
  %s10 = ssub.s32 1, %s8
  %s11 = scalar_select 0, %s10, %s8
  $region1: #{tpu_custom_call.1} parent=0
    #allocation2 [shape = 'u8[8192]{0}', space=vmem, size = 0x2000, scoped, tag = 'input window, operand 1, single buffered']
    #allocation3 [shape = 's32[2]{0}', space=sflag, size = 0x8, scoped, tag = 'scoped memory for tpu_custom_call.1']
    #allocation4 [shape = 's32[2]{0}', space=sflag, size = 0x8, scoped, tag = 'scoped memory for tpu_custom_call.1']
    #allocation5 [shape = 'u8[8192]{0}', space=vmem, size = 0x2000, scoped, tag = 'input window, operand 2, single buffered']
    #allocation6 [shape = 's32[1]{0}', space=sflag, size = 0x4, scoped, tag = 'scoped memory for tpu_custom_call.1']
    #allocation7 [shape = 'u8[4096]{0}', space=vmem, size = 0x1000, scoped, tag = 'input window, operand 3, single buffered']
    #allocation8 [shape = 'u8[4096]{0}', space=vmem, size = 0x1000, scoped, tag = 'input window, operand 4, single buffered']
    #allocation9 [shape = 's32[1]{0}', space=sflag, size = 0x4, scoped, tag = 'scoped memory for tpu_custom_call.1']
    #allocation10 [shape = 'u8[2097152]{0}', space=vmem, size = 0x200000, scoped, tag = 'input window, operand 5']
    #allocation11 [shape = 'u8[4096]{0}', space=vmem, size = 0x1000, scoped, tag = 'input window, operand 6']
    #allocation12 [shape = 'u8[1024]{0}', space=vmem, size = 0x400, scoped, tag = 'output window, operand 0']
    %12 = vsyncpa [#allocation3], 0
    %13 = vsyncpa [#allocation6], 0
    %14 = vsyncpa [#allocation9], 0
    %15 = vsyncpa [#allocation4], 0
    %s16 = scalar_lea.sflag [#allocation4], 1
    %17 = vsyncpa %s16, 0
    loop: start=0, step=1, limit=4
    $region2: #{tpu_custom_call.1} parent=1 // loop_pre_header
      _
    $region3: #{tpu_custom_call.1} parent=1 // loop_header
      %s19 = sphi 0, %s23
      %p20 = scmp.ge.s32.totalorder %s19, 4
      %s27 = sphi 0, %s27
      %s29 = sphi 0, %s27
      %s30 = sphi 0, %s29
      %s44 = sphi 0, %s30
      %s48 = sphi 0, %s48
      %s50 = sphi 0, %s48
      %s51 = sphi 0, %s50
      %s65 = sphi 0, %s51
      %s69 = sphi 0, %s69
      %s71 = sphi 0, %s69
      %s72 = sphi 0, %s71
      %s86 = sphi 0, %s72
      %s90 = sphi 0, %s90
      %s92 = sphi 0, %s90
      %s93 = sphi 0, %s92
      %s107 = sphi 0, %s93
      %s111 = sphi 0, %s111
      %s113 = sphi 0, %s111
      %s114 = sphi 0, %s113
      %s128 = sphi 0, %s114
      %s134 = sphi 0, %s136
      %s137 = sphi 0, %s134
      %s138 = sphi 0, %s137
      %s154 = sphi 0, %s138
      %s160 = sphi 0, %s162
      %s163 = sphi 0, %s160
      %s164 = sphi 0, %s163
      %s180 = sphi 0, %s164
      %s186 = sphi 0, %s188
      %s189 = sphi 0, %s186
      %s190 = sphi 0, %s189
      %s206 = sphi 0, %s190
    $region4: #{tpu_custom_call.1} parent=1 // loop_header_branch
      %22 = sbr.rel (%p20) target = $region8
    $region5: #{tpu_custom_call.1} parent=1 // loop_body
      %s24 = ssub.s32 %s19, 1
      %s25 = ssub.s32 %s19, 2
      %s26 = sadd.s32 %s19, 1
      %s28 = sadd.s32 %s27, 1
      %p31 = scmp.eq.s32.totalorder %s19, 1
      %p32 = scmp.ne.s32.totalorder %s27, %s29
      %p33 = scmp.eq.s32.totalorder %s19, 0
      %p34 = por %p32, %p33
      %p35 = scmp.ne.s32.totalorder %s27, %s29
      %p36 = scmp.eq.s32.totalorder %s24, 1
      %p37 = por %p35, %p36
      %p38 = scmp.ne.s32.totalorder %s29, %s30
      %p39 = scmp.eq.s32.totalorder %s24, 0
      %p40 = por %p38, %p39
      %p41 = scmp.ne.s32.totalorder %s29, %s30
      %p42 = scmp.eq.s32.totalorder %s25, 1
      %p43 = por %p41, %p42
      %p45 = scmp.ne.s32.totalorder %s30, %s44
      %p46 = scmp.eq.s32.totalorder %s25, 0
      %p47 = por %p45, %p46
      %s49 = sadd.s32 %s48, 1
      %p52 = scmp.eq.s32.totalorder %s19, 1
      %p53 = scmp.ne.s32.totalorder %s48, %s50
      %p54 = scmp.eq.s32.totalorder %s19, 0
      %p55 = por %p53, %p54
      %p56 = scmp.ne.s32.totalorder %s48, %s50
      %p57 = scmp.eq.s32.totalorder %s24, 1
      %p58 = por %p56, %p57
      %p59 = scmp.ne.s32.totalorder %s50, %s51
      %p60 = scmp.eq.s32.totalorder %s24, 0
      %p61 = por %p59, %p60
      %p62 = scmp.ne.s32.totalorder %s50, %s51
      %p63 = scmp.eq.s32.totalorder %s25, 1
      %p64 = por %p62, %p63
      %p66 = scmp.ne.s32.totalorder %s51, %s65
      %p67 = scmp.eq.s32.totalorder %s25, 0
      %p68 = por %p66, %p67
      %s70 = sadd.s32 %s69, 1
      %p73 = scmp.eq.s32.totalorder %s19, 1
      %p74 = scmp.ne.s32.totalorder %s69, %s71
      %p75 = scmp.eq.s32.totalorder %s19, 0
      %p76 = por %p74, %p75
      %p77 = scmp.ne.s32.totalorder %s69, %s71
      %p78 = scmp.eq.s32.totalorder %s24, 1
      %p79 = por %p77, %p78
      %p80 = scmp.ne.s32.totalorder %s71, %s72
      %p81 = scmp.eq.s32.totalorder %s24, 0
      %p82 = por %p80, %p81
      %p83 = scmp.ne.s32.totalorder %s71, %s72
      %p84 = scmp.eq.s32.totalorder %s25, 1
      %p85 = por %p83, %p84
      %p87 = scmp.ne.s32.totalorder %s72, %s86
      %p88 = scmp.eq.s32.totalorder %s25, 0
      %p89 = por %p87, %p88
      %s91 = sadd.s32 %s90, 1
      %p94 = scmp.eq.s32.totalorder %s19, 1
      %p95 = scmp.ne.s32.totalorder %s90, %s92
      %p96 = scmp.eq.s32.totalorder %s19, 0
      %p97 = por %p95, %p96
      %p98 = scmp.ne.s32.totalorder %s90, %s92
      %p99 = scmp.eq.s32.totalorder %s24, 1
      %p100 = por %p98, %p99
      %p101 = scmp.ne.s32.totalorder %s92, %s93
      %p102 = scmp.eq.s32.totalorder %s24, 0
      %p103 = por %p101, %p102
      %p104 = scmp.ne.s32.totalorder %s92, %s93
      %p105 = scmp.eq.s32.totalorder %s25, 1
      %p106 = por %p104, %p105
      %p108 = scmp.ne.s32.totalorder %s93, %s107
      %p109 = scmp.eq.s32.totalorder %s25, 0
      %p110 = por %p108, %p109
      %s112 = sadd.s32 %s111, 1
      %p115 = scmp.eq.s32.totalorder %s19, 1
      %p116 = scmp.ne.s32.totalorder %s111, %s113
      %p117 = scmp.eq.s32.totalorder %s19, 0
      %p118 = por %p116, %p117
      %p119 = scmp.ne.s32.totalorder %s111, %s113
      %p120 = scmp.eq.s32.totalorder %s24, 1
      %p121 = por %p119, %p120
      %p122 = scmp.ne.s32.totalorder %s113, %s114
      %p123 = scmp.eq.s32.totalorder %s24, 0
      %p124 = por %p122, %p123
      %p125 = scmp.ne.s32.totalorder %s113, %s114
      %p126 = scmp.eq.s32.totalorder %s25, 1
      %p127 = por %p125, %p126
      %p129 = scmp.ne.s32.totalorder %s114, %s128
      %p130 = scmp.eq.s32.totalorder %s25, 0
      %p131 = por %p129, %p130
      %s132 = ssub.s32 %s19, %s26
      %p133 = scmp.eq.s32.totalorder %s132, 0
      %s135 = sadd.s32 %s134, 1
      %s136 = scalar_select %p133, %s134, %s135
      %p139 = pneg %p133
      %p140 = scmp.eq.s32.totalorder %s19, 1
      %p141 = por %p139, %p140
      %p142 = scmp.ne.s32.totalorder %s134, %s137
      %p143 = scmp.eq.s32.totalorder %s19, 0
      %p144 = por %p142, %p143
      %p145 = scmp.ne.s32.totalorder %s134, %s137
      %p146 = scmp.eq.s32.totalorder %s24, 1
      %p147 = por %p145, %p146
      %p148 = scmp.ne.s32.totalorder %s137, %s138
      %p149 = scmp.eq.s32.totalorder %s24, 0
      %p150 = por %p148, %p149
      %p151 = scmp.ne.s32.totalorder %s137, %s138
      %p152 = scmp.eq.s32.totalorder %s25, 1
      %p153 = por %p151, %p152
      %p155 = scmp.ne.s32.totalorder %s138, %s154
      %p156 = scmp.eq.s32.totalorder %s25, 0
      %p157 = por %p155, %p156
      %s158 = ssub.s32 %s19, %s26
      %p159 = scmp.eq.s32.totalorder %s158, 0
      %s161 = sadd.s32 %s160, 1
      %s162 = scalar_select %p159, %s160, %s161
      %p165 = pneg %p159
      %p166 = scmp.eq.s32.totalorder %s19, 1
      %p167 = por %p165, %p166
      %p168 = scmp.ne.s32.totalorder %s160, %s163
      %p169 = scmp.eq.s32.totalorder %s19, 0
      %p170 = por %p168, %p169
      %p171 = scmp.ne.s32.totalorder %s160, %s163
      %p172 = scmp.eq.s32.totalorder %s24, 1
      %p173 = por %p171, %p172
      %p174 = scmp.ne.s32.totalorder %s163, %s164
      %p175 = scmp.eq.s32.totalorder %s24, 0
      %p176 = por %p174, %p175
      %p177 = scmp.ne.s32.totalorder %s163, %s164
      %p178 = scmp.eq.s32.totalorder %s25, 1
      %p179 = por %p177, %p178
      %p181 = scmp.ne.s32.totalorder %s164, %s180
      %p182 = scmp.eq.s32.totalorder %s25, 0
      %p183 = por %p181, %p182
      %s184 = ssub.s32 %s19, %s26
      %p185 = scmp.eq.s32.totalorder %s184, 0
      %s187 = sadd.s32 %s186, 1
      %s188 = scalar_select %p185, %s186, %s187
      %p191 = pneg %p185
      %p192 = scmp.eq.s32.totalorder %s19, 1
      %p193 = por %p191, %p192
      %p194 = scmp.ne.s32.totalorder %s186, %s189
      %p195 = scmp.eq.s32.totalorder %s19, 0
      %p196 = por %p194, %p195
      %p197 = scmp.ne.s32.totalorder %s186, %s189
      %p198 = scmp.eq.s32.totalorder %s24, 1
      %p199 = por %p197, %p198
      %p200 = scmp.ne.s32.totalorder %s189, %s190
      %p201 = scmp.eq.s32.totalorder %s24, 0
      %p202 = por %p200, %p201
      %p203 = scmp.ne.s32.totalorder %s189, %s190
      %p204 = scmp.eq.s32.totalorder %s25, 1
      %p205 = por %p203, %p204
      %p207 = scmp.ne.s32.totalorder %s190, %s206
      %p208 = scmp.eq.s32.totalorder %s25, 0
      %p209 = por %p207, %p208
      %p210 = scmp.le.s32.totalorder 1, %s19
      %p211 = scmp.lt.s32.totalorder %s19, 3
      %p212 = pnand %p210, %p211
      %p213 = pneg %p212
      // Predicated region
      $region9: #{tpu_custom_call.1} parent=5 // pred_check
        _
      $region10: #{tpu_custom_call.1} parent=5 // pred_check_branch
        %215 = sbr.rel (%p212) target = $region12
      $region11: #{tpu_custom_call.1} parent=5 // pred_region
        %s216 = ssub.s32 %s19, 1
        // Predicated region
        $region13: #{tpu_custom_call.1} parent=11 // pred_check
          %p217 = pneg %p40
        $region14: #{tpu_custom_call.1} parent=11 // pred_check_branch
          %219 = sbr.rel (%p217) target = $region16
        $region15: #{tpu_custom_call.1} parent=11 // pred_region
          _
        $region16: #{tpu_custom_call.1} parent=11 // pred_fallthru
          _
        // Predicated region
        $region17: #{tpu_custom_call.1} parent=11 // pred_check
          %p220 = pneg %p61
        $region18: #{tpu_custom_call.1} parent=11 // pred_check_branch
          %222 = sbr.rel (%p220) target = $region20
        $region19: #{tpu_custom_call.1} parent=11 // pred_region
          %224 = vsyncadd [#allocation3], 0
          %s226 = sshll.u32 %s1, 4
          %s227 = int_to_ptr.hbm [resolvable:$true] %s226
          %s228 = sshll.u32 [#allocation2], 4
          %s229 = int_to_ptr.vmem [resolvable:$true] %s228
          %231 = dma.hbm_to_vmem [thread:$0]  %s227, 256, %s229, [#allocation3]
        $region20: #{tpu_custom_call.1} parent=11 // pred_fallthru
          _
        // Predicated region
        $region21: #{tpu_custom_call.1} parent=11 // pred_check
          %p232 = pneg %p82
        $region22: #{tpu_custom_call.1} parent=11 // pred_check_branch
          %234 = sbr.rel (%p232) target = $region24
        $region23: #{tpu_custom_call.1} parent=11 // pred_region
          %236 = vsyncadd [#allocation6], 0
          %s238 = sshll.u32 %s2, 4
          %s239 = int_to_ptr.hbm [resolvable:$true] %s238
          %s240 = sshll.u32 [#allocation5], 4
          %s241 = int_to_ptr.vmem [resolvable:$true] %s240
          %243 = dma.hbm_to_vmem [thread:$0]  %s239, 256, %s241, [#allocation6]
        $region24: #{tpu_custom_call.1} parent=11 // pred_fallthru
          _
        // Predicated region
        $region25: #{tpu_custom_call.1} parent=11 // pred_check
          %p244 = pneg %p103
        $region26: #{tpu_custom_call.1} parent=11 // pred_check_branch
          %246 = sbr.rel (%p244) target = $region28
        $region27: #{tpu_custom_call.1} parent=11 // pred_region
          %248 = vsyncadd [#allocation6], 0
          %s250 = sshll.u32 %s3, 4
          %s251 = int_to_ptr.hbm [resolvable:$true] %s250
          %s252 = sshll.u32 [#allocation7], 4
          %s253 = int_to_ptr.vmem [resolvable:$true] %s252
          %255 = dma.hbm_to_vmem [thread:$0]  %s251, 128, %s253, [#allocation6]
        $region28: #{tpu_custom_call.1} parent=11 // pred_fallthru
          _
        // Predicated region
        $region29: #{tpu_custom_call.1} parent=11 // pred_check
          %p256 = pneg %p124
        $region30: #{tpu_custom_call.1} parent=11 // pred_check_branch
          %258 = sbr.rel (%p256) target = $region32
        $region31: #{tpu_custom_call.1} parent=11 // pred_region
          %260 = vsyncadd [#allocation9], 0
          %s262 = sshll.u32 %s4, 4
          %s263 = int_to_ptr.hbm [resolvable:$true] %s262
          %s264 = sshll.u32 [#allocation8], 4
          %s265 = int_to_ptr.vmem [resolvable:$true] %s264
          %267 = dma.hbm_to_vmem [thread:$0]  %s263, 128, %s265, [#allocation9]
        $region32: #{tpu_custom_call.1} parent=11 // pred_fallthru
          _
      $region12: #{tpu_custom_call.1} parent=5 // pred_fallthru
        _
      %p268 = scmp.lt.s32.totalorder %s19, 2
      // Predicated region
      $region33: #{tpu_custom_call.1} parent=5 // pred_check
        %p269 = pneg %p268
      $region34: #{tpu_custom_call.1} parent=5 // pred_check_branch
        %271 = sbr.rel (%p269) target = $region36
      $region35: #{tpu_custom_call.1} parent=5 // pred_region
        // Predicated region
        $region37: #{tpu_custom_call.1} parent=35 // pred_check
          %p272 = pneg %p144
        $region38: #{tpu_custom_call.1} parent=35 // pred_check_branch
          %274 = sbr.rel (%p272) target = $region40
        $region39: #{tpu_custom_call.1} parent=35 // pred_region
          %s275 = sand.u32 %s19, 1
          %s276 = scalar_lea.sflag [#allocation3], %s275
          %s277 = sand.u32 %s134, 1
          %s278 = smul.addr %s277, 2048
          %s279 = scalar_lea.vmem [#allocation10], %s278
          %s280 = smul.u32 4, %s19
          %282 = vsyncadd %s276, 0
          %s283 = smul.addr %s280, 4
          %s284 = scalar_lea.hbm %s5, %s283
          %s285 = sshll.u32 %s284, 4
          %s286 = int_to_ptr.hbm [resolvable:$true] %s285
          %s287 = sshll.u32 %s279, 4
          %s288 = int_to_ptr.vmem [resolvable:$true] %s287
          %293 = dma.hbm_to_vmem [thread:$0]  %s286, 32768, %s288, %s276, 512, 256, 16
        $region40: #{tpu_custom_call.1} parent=35 // pred_fallthru
          _
        // Predicated region
        $region41: #{tpu_custom_call.1} parent=35 // pred_check
          %p294 = pneg %p170
        $region42: #{tpu_custom_call.1} parent=35 // pred_check_branch
          %296 = sbr.rel (%p294) target = $region44
        $region43: #{tpu_custom_call.1} parent=35 // pred_region
          %s297 = sand.u32 %s19, 1
          %s298 = scalar_lea.sflag [#allocation3], %s297
          %s299 = sand.u32 %s160, 1
          %s300 = smul.addr %s299, 4
          %s301 = scalar_lea.vmem [#allocation11], %s300
          %s302 = smul.u32 4, %s19
          %304 = vsyncadd %s298, 0
          %s305 = scalar_lea.hbm %s6, %s302
          %s307 = sshll.u32 %s305, 4
          %s308 = int_to_ptr.hbm [resolvable:$true] %s307
          %s309 = sshll.u32 %s301, 4
          %s310 = int_to_ptr.vmem [resolvable:$true] %s309
          %312 = dma.hbm_to_vmem [thread:$0]  %s308, 64, %s310, %s298
        $region44: #{tpu_custom_call.1} parent=35 // pred_fallthru
          _
      $region36: #{tpu_custom_call.1} parent=5 // pred_fallthru
        _
      %p313 = scmp.le.s32.totalorder 1, %s19
      %p314 = scmp.lt.s32.totalorder %s19, 3
      %p315 = pnand %p313, %p314
      %p316 = pneg %p315
      // Predicated region
      $region45: #{tpu_custom_call.1} parent=5 // pred_check
        _
      $region46: #{tpu_custom_call.1} parent=5 // pred_check_branch
        %318 = sbr.rel (%p315) target = $region48
      $region47: #{tpu_custom_call.1} parent=5 // pred_region
        %s319 = ssub.s32 %s19, 1
        // Predicated region
        $region49: #{tpu_custom_call.1} parent=47 // pred_check
          %p320 = pneg %p61
        $region50: #{tpu_custom_call.1} parent=47 // pred_check_branch
          %322 = sbr.rel (%p320) target = $region52
        $region51: #{tpu_custom_call.1} parent=47 // pred_region
          %324 = dma.done [#allocation3], 256
        $region52: #{tpu_custom_call.1} parent=47 // pred_fallthru
          _
        // Predicated region
        $region53: #{tpu_custom_call.1} parent=47 // pred_check
          %p325 = pneg %p82
        $region54: #{tpu_custom_call.1} parent=47 // pred_check_branch
          %327 = sbr.rel (%p325) target = $region56
        $region55: #{tpu_custom_call.1} parent=47 // pred_region
          %329 = dma.done [#allocation6], 256
        $region56: #{tpu_custom_call.1} parent=47 // pred_fallthru
          _
        // Predicated region
        $region57: #{tpu_custom_call.1} parent=47 // pred_check
          %p330 = pneg %p103
        $region58: #{tpu_custom_call.1} parent=47 // pred_check_branch
          %332 = sbr.rel (%p330) target = $region60
        $region59: #{tpu_custom_call.1} parent=47 // pred_region
          %334 = dma.done [#allocation6], 128
        $region60: #{tpu_custom_call.1} parent=47 // pred_fallthru
          _
        // Predicated region
        $region61: #{tpu_custom_call.1} parent=47 // pred_check
          %p335 = pneg %p124
        $region62: #{tpu_custom_call.1} parent=47 // pred_check_branch
          %337 = sbr.rel (%p335) target = $region64
        $region63: #{tpu_custom_call.1} parent=47 // pred_region
          %339 = dma.done [#allocation9], 128
        $region64: #{tpu_custom_call.1} parent=47 // pred_fallthru
          _
        %s340 = sand.u32 %s24, 1
        %s341 = scalar_lea.sflag [#allocation3], %s340
        %s342 = sand.u32 %s137, 1
        %s343 = smul.addr %s342, 2048
        %s344 = scalar_lea.vmem [#allocation10], %s343
        // Predicated region
        $region65: #{tpu_custom_call.1} parent=47 // pred_check
          %p345 = pneg %p150
        $region66: #{tpu_custom_call.1} parent=47 // pred_check_branch
          %347 = sbr.rel (%p345) target = $region68
        $region67: #{tpu_custom_call.1} parent=47 // pred_region
          %349 = dma.done %s341, 32768
        $region68: #{tpu_custom_call.1} parent=47 // pred_fallthru
          _
        %s350 = sand.u32 %s24, 1
        %s351 = scalar_lea.sflag [#allocation3], %s350
        %s352 = sand.u32 %s163, 1
        %s353 = smul.addr %s352, 4
        %s354 = scalar_lea.vmem [#allocation11], %s353
        // Predicated region
        $region69: #{tpu_custom_call.1} parent=47 // pred_check
          %p355 = pneg %p176
        $region70: #{tpu_custom_call.1} parent=47 // pred_check_branch
          %357 = sbr.rel (%p355) target = $region72
        $region71: #{tpu_custom_call.1} parent=47 // pred_region
          %359 = dma.done %s351, 64
        $region72: #{tpu_custom_call.1} parent=47 // pred_fallthru
          _
        %p360 = pneg %p40
        %p361 = pneg %p37
        %p362 = pneg %p61
        %p363 = pneg %p58
        %p364 = pneg %p82
        %p365 = pneg %p79
        %p366 = pneg %p103
        %p367 = pneg %p100
        %p368 = pneg %p124
        %p369 = pneg %p121
        %s370 = sand.u32 %s24, 1
        %s371 = scalar_lea.sflag [#allocation3], %s370
        %s372 = sand.u32 %s137, 1
        %s373 = smul.addr %s372, 2048
        %s374 = scalar_lea.vmem [#allocation10], %s373
        %p375 = pneg %p150
        %p376 = pneg %p147
        %s377 = sand.u32 %s24, 1
        %s378 = scalar_lea.sflag [#allocation3], %s377
        %s379 = sand.u32 %s163, 1
        %s380 = smul.addr %s379, 4
        %s381 = scalar_lea.vmem [#allocation11], %s380
        %p382 = pneg %p176
        %p383 = pneg %p173
        %p384 = pneg %p202
        %p385 = pneg %p199
        %s386 = sand.u32 %s189, 1
        %s387 = scalar_lea.sflag [#allocation4], %s386
        %s388 = sand.u32 %s189, 1
        %s389 = scalar_lea.vmem [#allocation12], %s388
        %s390 = smul.u32 4, %s24
        %s391 = smul.u32 4, %s24
        %v392 = vld [vmem:[%s0] sm:$0x3]
        %v393 = vmul.f32 %v392, 1.5707964
        %v394 = vand.u32 2147483647, %v393
        %vm395 = vcmp.le.f32.partialorder %v394, 0.7853982
        %vm396 = vcmp.lt.s32.totalorder %v393, 0
        %v397 = vand.u32 %v393, 2139095040
        %v398 = vshrl.u32 %v397, 23
        %v399 = vsub.s32 %v398, 127
        %v400 = vand.u32 2147483647, %v393
        %v401 = vand.u32 %v400, 8388607
        %v402 = vor.u32 %v401, 8388608
        %v403 = vsub.s32 0, %v402
        %v404 = vadd.s32 %v399, 1
        %vm405 = vcmp.gt.s32.totalorder %v404, 0
        %v406 = vsel %vm405, %v404, 0
        %v407 = vshrl.u32 %v406, 5
        %v408 = vand.u32 %v406, 31
        %v409 = vsub.s32 32, %v408
        %v410 = vshrl.u32 683565275, %v409
        %v411 = vshll.u32 683565275, %v408
        %v412 = vshrl.u32 2475754826, %v409
        %v413 = vor.u32 %v411, %v412
        %v414 = vshll.u32 2475754826, %v408
        %v415 = vshrl.u32 2131351028, %v409
        %v416 = vor.u32 %v414, %v415
        %v417 = vshll.u32 2131351028, %v408
        %v418 = vshrl.u32 2102212464, %v409
        %v419 = vor.u32 %v417, %v418
        %v420 = vshll.u32 2102212464, %v408
        %v421 = vshrl.u32 920167782, %v409
        %v422 = vor.u32 %v420, %v421
        %v423 = vshll.u32 920167782, %v408
        %v424 = vshrl.u32 1326507024, %v409
        %v425 = vor.u32 %v423, %v424
        %vm426 = vcmp.lt.s32.totalorder %v407, 1
        %vm427 = vcmp.lt.s32.totalorder %v407, 2
        %vm428 = vcmp.lt.s32.totalorder %v407, 3
        %vm429 = vcmp.lt.s32.totalorder %v407, 4
        %v430 = vsel %vm426, %v410, %v413
        %v431 = vsel %vm429, %v419, 2102212464
        %v432 = vsel %vm428, %v416, %v431
        %v433 = vsel %vm427, %v430, %v432
        %v434 = vsel %vm426, %v413, %v416
        %v435 = vsel %vm429, %v422, 920167782
        %v436 = vsel %vm428, %v419, %v435
        %v437 = vsel %vm427, %v434, %v436
        %v438 = vsel %vm426, %v416, %v419
        %v439 = vsel %vm429, %v425, 1326507024
        %v440 = vsel %vm428, %v422, %v439
        %v441 = vsel %vm427, %v438, %v440
        %v442 = vshll.u32 %v402, 8
        %v443 = vand.u32 %v442, 65535
        %v444 = vshrl.u32 %v442, 16
        %v445 = vand.u32 %v441, 65535
        %v446 = vshrl.u32 %v441, 16
        %v447 = vmul.u32 %v443, %v445
        %v448 = vmul.u32 %v443, %v446
        %v449 = vmul.u32 %v444, %v445
        %v450 = vmul.u32 %v444, %v446
        %v451 = vshll.u32 %v448, 16
        %v452 = vshrl.u32 %v448, 16
        %v453 = vshll.u32 %v449, 16
        %v454 = vshrl.u32 %v449, 16
        %vm455 = vc.u32 %v447, %v451
        %v456 = vsel %vm455, 1, 0
        %v457 = vadd.s32 %v447, %v451
        %v458 = vadd.s32 %v450, %v456
        %vm459 = vc.u32 %v457, %v453
        %v460 = vsel %vm459, 1, 0
        %v461 = vadd.s32 %v457, %v453
        %v462 = vadd.s32 %v458, %v460
        %v463 = vadd.s32 %v462, %v452
        %v464 = vadd.s32 %v463, %v454
        %v465 = vand.u32 %v442, 65535
        %v466 = vshrl.u32 %v442, 16
        %v467 = vand.u32 %v437, 65535
        %v468 = vshrl.u32 %v437, 16
        %v469 = vmul.u32 %v465, %v467
        %v470 = vmul.u32 %v465, %v468
        %v471 = vmul.u32 %v466, %v467
        %v472 = vmul.u32 %v466, %v468
        %v473 = vshll.u32 %v470, 16
        %v474 = vshrl.u32 %v470, 16
        %v475 = vshll.u32 %v471, 16
        %v476 = vshrl.u32 %v471, 16
        %vm477 = vc.u32 %v469, %v473
        %v478 = vsel %vm477, 1, 0
        %v479 = vadd.s32 %v469, %v473
        %v480 = vadd.s32 %v472, %v478
        %vm481 = vc.u32 %v479, %v475
        %v482 = vsel %vm481, 1, 0
        %v483 = vadd.s32 %v479, %v475
        %v484 = vadd.s32 %v480, %v482
        %v485 = vadd.s32 %v484, %v474
        %v486 = vadd.s32 %v485, %v476
        %v487 = vmul.u32 %v442, %v433
        %v488 = vadd.s32 %v464, %v483
        %vm489 = vc.u32 %v464, %v483
        %v490 = vadd.s32 %v486, 1
        %v491 = vsel %vm489, %v490, %v486
        %v492 = vadd.s32 %v487, %v491
        %v493 = vadd.s32 %v492, 536870912
        %v494 = vshrl.u32 %v493, 30
        %v495 = vshll.u32 %v494, 30
        %v496 = vsub.s32 %v492, %v495
        %vm497 = vcmp.lt.s32.totalorder %v496, 0
        %v498 = vsub.s32 0, %v496
        %v499 = vsel %vm497, %v498, %v496
        %v500 = vclz %v499
        %v501 = vsub.s32 %v500, 2
        %vm502 = vcmp.gt.s32.totalorder 0, %v501
        %v503 = vsel %vm502, 0, %v501
        %v504 = vsub.s32 32, %v503
        %v505 = vshll.u32 %v496, %v503
        %v506 = vshrl.u32 %v488, %v504
        %v507 = vor.u32 %v505, %v506
        %v508 = vsub.s32 4294967266, %v503
        %v509 = vadd.s32 %v508, 127
        %v510 = vshll.u32 %v509, 23
        %v511 = vor.u32 4788187, %v510
        %v512 = vand.u32 2147483647, %v511
        %v514 = vcvt.s32.f32 %v507
        %v515 = vmul.f32 %v514, %v512
        %v516 = vxor.u32 %v515, 2147483648
        %v517 = vsel %vm396, %v516, %v515
        %v518 = vsub.s32 4, %v494
        %v519 = vsel %vm396, %v518, %v494
        %v520 = vsel %vm395, %v393, %v517
        %v521 = vsel %vm395, 0, %v519
        %v522 = vmul.f32 %v520, %v520
        %v523 = vmul.f32 %v522, -0.001358992
        %v524 = vadd.f32 %v523, 0.041655596
        %v525 = vmul.f32 %v522, %v524
        %v526 = vadd.f32 %v525, -0.4999988
        %v527 = vmul.f32 %v522, %v526
        %v528 = vadd.f32 1.0, %v527
        %v529 = vmul.f32 %v520, %v520
        %v530 = vmul.f32 %v529, -0.00019511016
        %v531 = vadd.f32 %v530, 0.008332121
        %v532 = vmul.f32 %v529, %v531
        %v533 = vadd.f32 %v532, -0.16666654
        %v534 = vmul.f32 %v529, %v533
        %v535 = vadd.f32 %v534, 1.0
        %v536 = vmul.f32 %v535, %v520
        %vm537 = vweird.f32 %v393
        %v538 = vand.u32 %v521, 3
        %vm539 = vcmp.lt.s32.totalorder %v538, 2
        %vm540 = vcmp.eq.s32.totalorder %v538, 0
        %v541 = vxor.u32 %v536, 2147483648
        %v542 = vsel %vm540, %v528, %v541
        %vm543 = vcmp.eq.s32.totalorder %v538, 2
        %v544 = vxor.u32 %v528, 2147483648
        %v545 = vsel %vm543, %v544, %v536
        %v546 = vsel %vm539, %v542, %v545
        %v547 = vsel %vm537, nan, %v546
        %v548 = vand.u32 2147483647, %v393
        %vm549 = vcmp.le.f32.partialorder %v548, 0.7853982
        %vm550 = vcmp.lt.s32.totalorder %v393, 0
        %v551 = vand.u32 %v393, 2139095040
        %v552 = vshrl.u32 %v551, 23
        %v553 = vsub.s32 %v552, 127
        %v554 = vand.u32 2147483647, %v393
        %v555 = vand.u32 %v554, 8388607
        %v556 = vor.u32 %v555, 8388608
        %v557 = vsub.s32 0, %v556
        %v558 = vadd.s32 %v553, 1
        %vm559 = vcmp.gt.s32.totalorder %v558, 0
        %v560 = vsel %vm559, %v558, 0
        %v561 = vshrl.u32 %v560, 5
        %v562 = vand.u32 %v560, 31
        %v563 = vsub.s32 32, %v562
        %v564 = vshrl.u32 683565275, %v563
        %v565 = vshll.u32 683565275, %v562
        %v566 = vshrl.u32 2475754826, %v563
        %v567 = vor.u32 %v565, %v566
        %v568 = vshll.u32 2475754826, %v562
        %v569 = vshrl.u32 2131351028, %v563
        %v570 = vor.u32 %v568, %v569
        %v571 = vshll.u32 2131351028, %v562
        %v572 = vshrl.u32 2102212464, %v563
        %v573 = vor.u32 %v571, %v572
        %v574 = vshll.u32 2102212464, %v562
        %v575 = vshrl.u32 920167782, %v563
        %v576 = vor.u32 %v574, %v575
        %v577 = vshll.u32 920167782, %v562
        %v578 = vshrl.u32 1326507024, %v563
        %v579 = vor.u32 %v577, %v578
        %vm580 = vcmp.lt.s32.totalorder %v561, 1
        %vm581 = vcmp.lt.s32.totalorder %v561, 2
        %vm582 = vcmp.lt.s32.totalorder %v561, 3
        %vm583 = vcmp.lt.s32.totalorder %v561, 4
        %v584 = vsel %vm580, %v564, %v567
        %v585 = vsel %vm583, %v573, 2102212464
        %v586 = vsel %vm582, %v570, %v585
        %v587 = vsel %vm581, %v584, %v586
        %v588 = vsel %vm580, %v567, %v570
        %v589 = vsel %vm583, %v576, 920167782
        %v590 = vsel %vm582, %v573, %v589
        %v591 = vsel %vm581, %v588, %v590
        %v592 = vsel %vm580, %v570, %v573
        %v593 = vsel %vm583, %v579, 1326507024
        %v594 = vsel %vm582, %v576, %v593
        %v595 = vsel %vm581, %v592, %v594
        %v596 = vshll.u32 %v556, 8
        %v597 = vand.u32 %v596, 65535
        %v598 = vshrl.u32 %v596, 16
        %v599 = vand.u32 %v595, 65535
        %v600 = vshrl.u32 %v595, 16
        %v601 = vmul.u32 %v597, %v599
        %v602 = vmul.u32 %v597, %v600
        %v603 = vmul.u32 %v598, %v599
        %v604 = vmul.u32 %v598, %v600
        %v605 = vshll.u32 %v602, 16
        %v606 = vshrl.u32 %v602, 16
        %v607 = vshll.u32 %v603, 16
        %v608 = vshrl.u32 %v603, 16
        %vm609 = vc.u32 %v601, %v605
        %v610 = vsel %vm609, 1, 0
        %v611 = vadd.s32 %v601, %v605
        %v612 = vadd.s32 %v604, %v610
        %vm613 = vc.u32 %v611, %v607
        %v614 = vsel %vm613, 1, 0
        %v615 = vadd.s32 %v611, %v607
        %v616 = vadd.s32 %v612, %v614
        %v617 = vadd.s32 %v616, %v606
        %v618 = vadd.s32 %v617, %v608
        %v619 = vand.u32 %v596, 65535
        %v620 = vshrl.u32 %v596, 16
        %v621 = vand.u32 %v591, 65535
        %v622 = vshrl.u32 %v591, 16
        %v623 = vmul.u32 %v619, %v621
        %v624 = vmul.u32 %v619, %v622
        %v625 = vmul.u32 %v620, %v621
        %v626 = vmul.u32 %v620, %v622
        %v627 = vshll.u32 %v624, 16
        %v628 = vshrl.u32 %v624, 16
        %v629 = vshll.u32 %v625, 16
        %v630 = vshrl.u32 %v625, 16
        %vm631 = vc.u32 %v623, %v627
        %v632 = vsel %vm631, 1, 0
        %v633 = vadd.s32 %v623, %v627
        %v634 = vadd.s32 %v626, %v632
        %vm635 = vc.u32 %v633, %v629
        %v636 = vsel %vm635, 1, 0
        %v637 = vadd.s32 %v633, %v629
        %v638 = vadd.s32 %v634, %v636
        %v639 = vadd.s32 %v638, %v628
        %v640 = vadd.s32 %v639, %v630
        %v641 = vmul.u32 %v596, %v587
        %v642 = vadd.s32 %v618, %v637
        %vm643 = vc.u32 %v618, %v637
        %v644 = vadd.s32 %v640, 1
        %v645 = vsel %vm643, %v644, %v640
        %v646 = vadd.s32 %v641, %v645
        %v647 = vadd.s32 %v646, 536870912
        %v648 = vshrl.u32 %v647, 30
        %v649 = vshll.u32 %v648, 30
        %v650 = vsub.s32 %v646, %v649
        %vm651 = vcmp.lt.s32.totalorder %v650, 0
        %v652 = vsub.s32 0, %v650
        %v653 = vsel %vm651, %v652, %v650
        %v654 = vclz %v653
        %v655 = vsub.s32 %v654, 2
        %vm656 = vcmp.gt.s32.totalorder 0, %v655
        %v657 = vsel %vm656, 0, %v655
        %v658 = vsub.s32 32, %v657
        %v659 = vshll.u32 %v650, %v657
        %v660 = vshrl.u32 %v642, %v658
        %v661 = vor.u32 %v659, %v660
        %v662 = vsub.s32 4294967266, %v657
        %v663 = vadd.s32 %v662, 127
        %v664 = vshll.u32 %v663, 23
        %v665 = vor.u32 4788187, %v664
        %v666 = vand.u32 2147483647, %v665
        %v668 = vcvt.s32.f32 %v661
        %v669 = vmul.f32 %v668, %v666
        %v670 = vxor.u32 %v669, 2147483648
        %v671 = vsel %vm550, %v670, %v669
        %v672 = vsub.s32 4, %v648
        %v673 = vsel %vm550, %v672, %v648
        %v674 = vsel %vm549, %v393, %v671
        %v675 = vsel %vm549, 0, %v673
        %v676 = vmul.f32 %v674, %v674
        %v677 = vmul.f32 %v676, -0.001358992
        %v678 = vadd.f32 %v677, 0.041655596
        %v679 = vmul.f32 %v676, %v678
        %v680 = vadd.f32 %v679, -0.4999988
        %v681 = vmul.f32 %v676, %v680
        %v682 = vadd.f32 1.0, %v681
        %v683 = vmul.f32 %v674, %v674
        %v684 = vmul.f32 %v683, -0.00019511016
        %v685 = vadd.f32 %v684, 0.008332121
        %v686 = vmul.f32 %v683, %v685
        %v687 = vadd.f32 %v686, -0.16666654
        %v688 = vmul.f32 %v683, %v687
        %v689 = vadd.f32 %v688, 1.0
        %v690 = vmul.f32 %v689, %v674
        %vm691 = vweird.f32 %v393
        %v692 = vadd.s32 %v675, 3
        %v693 = vand.u32 %v692, 3
        %vm694 = vcmp.lt.s32.totalorder %v693, 2
        %vm695 = vcmp.eq.s32.totalorder %v693, 0
        %v696 = vxor.u32 %v690, 2147483648
        %v697 = vsel %vm695, %v682, %v696
        %vm698 = vcmp.eq.s32.totalorder %v693, 2
        %v699 = vxor.u32 %v682, 2147483648
        %v700 = vsel %vm698, %v699, %v690
        %v701 = vsel %vm694, %v697, %v700
        %v702 = vsel %vm691, nan, %v701
        %v703 = vadd.f32 %v702, %v547
        %v704 = vrcp.pop %v703
        %v705 = vmul.f32 %v703, %v704
        %v706 = vsub.f32 1.0, %v705
        %v707 = vmul.f32 %v704, %v706
        %v708 = vadd.f32 %v704, %v707
        %vm709 = vweird.f32 %v703
        %vm710 = vweird.f32 %v704
        %vm711 = vmor %vm709, %vm710
        %v712 = vsel %vm711, %v704, %v708
        %v713 = vand.u32 2147483647, %v703
        %vm714 = vcmp.eq.f32.partialorder %v713, 8.507059e+37
        %v715 = vand.u32 %v703, 2147483648
        %v716 = vor.u32 1.1754944e-38, %v715
        %v717 = vsel %vm714, %v716, %v712
        %v718 = vmul.f32 %v547, %v717
        %v719 = vsub.f32 1.0, %v718
        %v720 = vld [vmem:[#allocation2] sm:$0xff]
        %v721 = vld [vmem:[#allocation2 + $0x8] sm:$0xff]
        %v722 = vld [vmem:[#allocation5] sm:$0xff]
        %v723 = vld [vmem:[#allocation5 + $0x8] sm:$0xff]
        %v724 = vld [vmem:[#allocation7] sm:$0xff]
        %v725 = vunpack.c.l.bf16 %v724
        %v726 = vunpack.c.h.bf16 %v724
        %v727 = vld [vmem:[#allocation8] sm:$0xff]
        %v728 = vunpack.c.l.bf16 %v727
        %v729 = vunpack.c.h.bf16 %v727
        %v730 = vsub.f32 %v720, %v722
        %v731 = vsub.f32 %v721, %v723
        %v734 = vperm.slane %v725, 0
        %v735 = vperm.slane %v725, 2
        %v736 = vperm.slane %v725, 4
        %v737 = vperm.slane %v725, 6
        %v738 = vperm.slane %v726, 0
        %v739 = vperm.slane %v726, 2
        %v740 = vperm.slane %v726, 4
        %v741 = vperm.slane %v726, 6
        %v750 = vperm.slane %v734, 0
        %v751 = vperm.slane %v735, 0
        %v752 = vperm.slane %v736, 0
        %v753 = vperm.slane %v737, 0
        %v754 = vperm.slane %v738, 0
        %v755 = vperm.slane %v739, 0
        %v756 = vperm.slane %v740, 0
        %v757 = vperm.slane %v741, 0
        %v766 = vrot.slane %v751, 6
        %v767 = vrot.slane %v752, 4
        %v768 = vrot.slane %v753, 2
        %v769 = vrot.slane %v755, 6
        %v770 = vrot.slane %v756, 4
        %v771 = vrot.slane %v757, 2
        %vm772 = vcmask 1041408
        %v773 = vsel %vm772, %v750, %v766
        %vm774 = vcmask 1045508
        %v775 = vsel %vm774, %v767, %v768
        %vm776 = vcmask 1043456
        %v777 = vsel %vm776, %v773, %v775
        %v778 = vsel %vm772, %v754, %v769
        %v779 = vsel %vm774, %v770, %v771
        %v780 = vsel %vm776, %v778, %v779
        %v783 = vadd.f32 %v730, %v777
        %v784 = vadd.f32 %v731, %v780
        %786 = vset.pattern.permute.xlu0 0
        %787 = vperm.xlu0 %786, %v719
        %v788 = vpop.permute.xlu0 %787
        %792 = vst [vmem:[#allocation1] ss:$4 sm:$0xff] %v783
        %s793 = scalar_lea.vmem [#allocation1], 32
        %794 = vst [vmem:[%s793] ss:$4 sm:$0xff] %v784
        %v795 = vld.sshfl [vmem:[#allocation1] sm:$0xff pattern:$0x73625140]
        %v796 = vld.sshfl [vmem:[#allocation1 + $0x8] sm:$0xff pattern:$0x73625140]
        %v797 = vld.sshfl [vmem:[#allocation1 + $0x10] sm:$0xff pattern:$0x73625140]
        %v798 = vld.sshfl [vmem:[#allocation1 + $0x18] sm:$0xff pattern:$0x73625140]
        %v799 = vld.sshfl [vmem:[#allocation1 + $0x20] sm:$0xff pattern:$0x73625140]
        %v800 = vld.sshfl [vmem:[#allocation1 + $0x28] sm:$0xff pattern:$0x73625140]
        %v801 = vld.sshfl [vmem:[#allocation1 + $0x30] sm:$0xff pattern:$0x73625140]
        %v802 = vld.sshfl [vmem:[#allocation1 + $0x38] sm:$0xff pattern:$0x73625140]
        %v811 = vmul.f32 %v788, %v795
        %v812 = vmul.f32 %v788, %v796
        %v813 = vmul.f32 %v788, %v797
        %v814 = vmul.f32 %v788, %v798
        %v815 = vmul.f32 %v788, %v799
        %v816 = vmul.f32 %v788, %v800
        %v817 = vmul.f32 %v788, %v801
        %v818 = vmul.f32 %v788, %v802
        %821 = vst [vmem:[#allocation1] ss:$4 sm:$0xff] %v722
        %s822 = scalar_lea.vmem [#allocation1], 32
        %823 = vst [vmem:[%s822] ss:$4 sm:$0xff] %v723
        %v824 = vld.sshfl [vmem:[#allocation1] sm:$0xff pattern:$0x73625140]
        %v825 = vld.sshfl [vmem:[#allocation1 + $0x8] sm:$0xff pattern:$0x73625140]
        %v826 = vld.sshfl [vmem:[#allocation1 + $0x10] sm:$0xff pattern:$0x73625140]
        %v827 = vld.sshfl [vmem:[#allocation1 + $0x18] sm:$0xff pattern:$0x73625140]
        %v828 = vld.sshfl [vmem:[#allocation1 + $0x20] sm:$0xff pattern:$0x73625140]
        %v829 = vld.sshfl [vmem:[#allocation1 + $0x28] sm:$0xff pattern:$0x73625140]
        %v830 = vld.sshfl [vmem:[#allocation1 + $0x30] sm:$0xff pattern:$0x73625140]
        %v831 = vld.sshfl [vmem:[#allocation1 + $0x38] sm:$0xff pattern:$0x73625140]
        %v840 = vadd.f32 %v811, %v824
        %v841 = vadd.f32 %v812, %v825
        %v842 = vadd.f32 %v813, %v826
        %v843 = vadd.f32 %v814, %v827
        %v844 = vadd.f32 %v815, %v828
        %v845 = vadd.f32 %v816, %v829
        %v846 = vadd.f32 %v817, %v830
        %v847 = vadd.f32 %v818, %v831
        %850 = vst [vmem:[#allocation1] ss:$4 sm:$0xff] %v728
        %s851 = scalar_lea.vmem [#allocation1], 32
        %852 = vst [vmem:[%s851] ss:$4 sm:$0xff] %v729
        %v853 = vld.sshfl [vmem:[#allocation1] sm:$0xff pattern:$0x73625140]
        %v854 = vld.sshfl [vmem:[#allocation1 + $0x8] sm:$0xff pattern:$0x73625140]
        %v855 = vld.sshfl [vmem:[#allocation1 + $0x10] sm:$0xff pattern:$0x73625140]
        %v856 = vld.sshfl [vmem:[#allocation1 + $0x18] sm:$0xff pattern:$0x73625140]
        %v857 = vld.sshfl [vmem:[#allocation1 + $0x20] sm:$0xff pattern:$0x73625140]
        %v858 = vld.sshfl [vmem:[#allocation1 + $0x28] sm:$0xff pattern:$0x73625140]
        %v859 = vld.sshfl [vmem:[#allocation1 + $0x30] sm:$0xff pattern:$0x73625140]
        %v860 = vld.sshfl [vmem:[#allocation1 + $0x38] sm:$0xff pattern:$0x73625140]
        %v869 = vadd.f32 %v840, %v853
        %v870 = vadd.f32 %v841, %v854
        %v871 = vadd.f32 %v842, %v855
        %v872 = vadd.f32 %v843, %v856
        %v873 = vadd.f32 %v844, %v857
        %v874 = vadd.f32 %v845, %v858
        %v875 = vadd.f32 %v846, %v859
        %v876 = vadd.f32 %v847, %v860
        %v877 = vpack.c.bf16 %v869, %v869
        %v878 = vpack.c.bf16 %v870, %v870
        %v879 = vpack.c.bf16 %v871, %v871
        %v880 = vpack.c.bf16 %v872, %v872
        %v881 = vpack.c.bf16 %v873, %v873
        %v882 = vpack.c.bf16 %v874, %v874
        %v883 = vpack.c.bf16 %v875, %v875
        %v884 = vpack.c.bf16 %v876, %v876
        %v885 = vld [vmem:[%s344] sm:$0xff]
        %v886 = vld [vmem:[%s344 + $0x8] sm:$0xff]
        %v887 = vld [vmem:[%s344 + $0x10] sm:$0xff]
        %v888 = vld [vmem:[%s344 + $0x18] sm:$0xff]
        %v889 = vld [vmem:[%s344 + $0x20] sm:$0xff]
        %v890 = vld [vmem:[%s344 + $0x28] sm:$0xff]
        %v891 = vld [vmem:[%s344 + $0x30] sm:$0xff]
        %v892 = vld [vmem:[%s344 + $0x38] sm:$0xff]
        %v893 = vld [vmem:[%s344 + $0x40] sm:$0xff]
        %v894 = vld [vmem:[%s344 + $0x48] sm:$0xff]
        %v895 = vld [vmem:[%s344 + $0x50] sm:$0xff]
        %v896 = vld [vmem:[%s344 + $0x58] sm:$0xff]
        %v897 = vld [vmem:[%s344 + $0x60] sm:$0xff]
        %v898 = vld [vmem:[%s344 + $0x68] sm:$0xff]
        %v899 = vld [vmem:[%s344 + $0x70] sm:$0xff]
        %v900 = vld [vmem:[%s344 + $0x78] sm:$0xff]
        %v901 = vld [vmem:[%s344 + $0x80] sm:$0xff]
        %v902 = vld [vmem:[%s344 + $0x88] sm:$0xff]
        %v903 = vld [vmem:[%s344 + $0x90] sm:$0xff]
        %v904 = vld [vmem:[%s344 + $0x98] sm:$0xff]
        %v905 = vld [vmem:[%s344 + $0xa0] sm:$0xff]
        %v906 = vld [vmem:[%s344 + $0xa8] sm:$0xff]
        %v907 = vld [vmem:[%s344 + $0xb0] sm:$0xff]
        %v908 = vld [vmem:[%s344 + $0xb8] sm:$0xff]
        %v909 = vld [vmem:[%s344 + $0xc0] sm:$0xff]
        %v910 = vld [vmem:[%s344 + $0xc8] sm:$0xff]
        %v911 = vld [vmem:[%s344 + $0xd0] sm:$0xff]
        %v912 = vld [vmem:[%s344 + $0xd8] sm:$0xff]
        %v913 = vld [vmem:[%s344 + $0xe0] sm:$0xff]
        %v914 = vld [vmem:[%s344 + $0xe8] sm:$0xff]
        %v915 = vld [vmem:[%s344 + $0xf0] sm:$0xff]
        %v916 = vld [vmem:[%s344 + $0xf8] sm:$0xff]
        %v917 = vld [vmem:[%s344 + $0x100] sm:$0xff]
        %v918 = vld [vmem:[%s344 + $0x108] sm:$0xff]
        %v919 = vld [vmem:[%s344 + $0x110] sm:$0xff]
        %v920 = vld [vmem:[%s344 + $0x118] sm:$0xff]
        %v921 = vld [vmem:[%s344 + $0x120] sm:$0xff]
        %v922 = vld [vmem:[%s344 + $0x128] sm:$0xff]
        %v923 = vld [vmem:[%s344 + $0x130] sm:$0xff]
        %v924 = vld [vmem:[%s344 + $0x138] sm:$0xff]
        %v925 = vld [vmem:[%s344 + $0x140] sm:$0xff]
        %v926 = vld [vmem:[%s344 + $0x148] sm:$0xff]
        %v927 = vld [vmem:[%s344 + $0x150] sm:$0xff]
        %v928 = vld [vmem:[%s344 + $0x158] sm:$0xff]
        %v929 = vld [vmem:[%s344 + $0x160] sm:$0xff]
        %v930 = vld [vmem:[%s344 + $0x168] sm:$0xff]
        %v931 = vld [vmem:[%s344 + $0x170] sm:$0xff]
        %v932 = vld [vmem:[%s344 + $0x178] sm:$0xff]
        %v933 = vld [vmem:[%s344 + $0x180] sm:$0xff]
        %v934 = vld [vmem:[%s344 + $0x188] sm:$0xff]
        %v935 = vld [vmem:[%s344 + $0x190] sm:$0xff]
        %v936 = vld [vmem:[%s344 + $0x198] sm:$0xff]
        %v937 = vld [vmem:[%s344 + $0x1a0] sm:$0xff]
        %v938 = vld [vmem:[%s344 + $0x1a8] sm:$0xff]
        %v939 = vld [vmem:[%s344 + $0x1b0] sm:$0xff]
        %v940 = vld [vmem:[%s344 + $0x1b8] sm:$0xff]
        %v941 = vld [vmem:[%s344 + $0x1c0] sm:$0xff]
        %v942 = vld [vmem:[%s344 + $0x1c8] sm:$0xff]
        %v943 = vld [vmem:[%s344 + $0x1d0] sm:$0xff]
        %v944 = vld [vmem:[%s344 + $0x1d8] sm:$0xff]
        %v945 = vld [vmem:[%s344 + $0x1e0] sm:$0xff]
        %v946 = vld [vmem:[%s344 + $0x1e8] sm:$0xff]
        %v947 = vld [vmem:[%s344 + $0x1f0] sm:$0xff]
        %v948 = vld [vmem:[%s344 + $0x1f8] sm:$0xff]
        %v949 = vld [vmem:[%s344 + $0x200] sm:$0xff]
        %v950 = vld [vmem:[%s344 + $0x208] sm:$0xff]
        %v951 = vld [vmem:[%s344 + $0x210] sm:$0xff]
        %v952 = vld [vmem:[%s344 + $0x218] sm:$0xff]
        %v953 = vld [vmem:[%s344 + $0x220] sm:$0xff]
        %v954 = vld [vmem:[%s344 + $0x228] sm:$0xff]
        %v955 = vld [vmem:[%s344 + $0x230] sm:$0xff]
        %v956 = vld [vmem:[%s344 + $0x238] sm:$0xff]
        %v957 = vld [vmem:[%s344 + $0x240] sm:$0xff]
        %v958 = vld [vmem:[%s344 + $0x248] sm:$0xff]
        %v959 = vld [vmem:[%s344 + $0x250] sm:$0xff]
        %v960 = vld [vmem:[%s344 + $0x258] sm:$0xff]
        %v961 = vld [vmem:[%s344 + $0x260] sm:$0xff]
        %v962 = vld [vmem:[%s344 + $0x268] sm:$0xff]
        %v963 = vld [vmem:[%s344 + $0x270] sm:$0xff]
        %v964 = vld [vmem:[%s344 + $0x278] sm:$0xff]
        %v965 = vld [vmem:[%s344 + $0x280] sm:$0xff]
        %v966 = vld [vmem:[%s344 + $0x288] sm:$0xff]
        %v967 = vld [vmem:[%s344 + $0x290] sm:$0xff]
        %v968 = vld [vmem:[%s344 + $0x298] sm:$0xff]
        %v969 = vld [vmem:[%s344 + $0x2a0] sm:$0xff]
        %v970 = vld [vmem:[%s344 + $0x2a8] sm:$0xff]
        %v971 = vld [vmem:[%s344 + $0x2b0] sm:$0xff]
        %v972 = vld [vmem:[%s344 + $0x2b8] sm:$0xff]
        %v973 = vld [vmem:[%s344 + $0x2c0] sm:$0xff]
        %v974 = vld [vmem:[%s344 + $0x2c8] sm:$0xff]
        %v975 = vld [vmem:[%s344 + $0x2d0] sm:$0xff]
        %v976 = vld [vmem:[%s344 + $0x2d8] sm:$0xff]
        %v977 = vld [vmem:[%s344 + $0x2e0] sm:$0xff]
        %v978 = vld [vmem:[%s344 + $0x2e8] sm:$0xff]
        %v979 = vld [vmem:[%s344 + $0x2f0] sm:$0xff]
        %v980 = vld [vmem:[%s344 + $0x2f8] sm:$0xff]
        %v981 = vld [vmem:[%s344 + $0x300] sm:$0xff]
        %v982 = vld [vmem:[%s344 + $0x308] sm:$0xff]
        %v983 = vld [vmem:[%s344 + $0x310] sm:$0xff]
        %v984 = vld [vmem:[%s344 + $0x318] sm:$0xff]
        %v985 = vld [vmem:[%s344 + $0x320] sm:$0xff]
        %v986 = vld [vmem:[%s344 + $0x328] sm:$0xff]
        %v987 = vld [vmem:[%s344 + $0x330] sm:$0xff]
        %v988 = vld [vmem:[%s344 + $0x338] sm:$0xff]
        %v989 = vld [vmem:[%s344 + $0x340] sm:$0xff]
        %v990 = vld [vmem:[%s344 + $0x348] sm:$0xff]
        %v991 = vld [vmem:[%s344 + $0x350] sm:$0xff]
        %v992 = vld [vmem:[%s344 + $0x358] sm:$0xff]
        %v993 = vld [vmem:[%s344 + $0x360] sm:$0xff]
        %v994 = vld [vmem:[%s344 + $0x368] sm:$0xff]
        %v995 = vld [vmem:[%s344 + $0x370] sm:$0xff]
        %v996 = vld [vmem:[%s344 + $0x378] sm:$0xff]
        %v997 = vld [vmem:[%s344 + $0x380] sm:$0xff]
        %v998 = vld [vmem:[%s344 + $0x388] sm:$0xff]
        %v999 = vld [vmem:[%s344 + $0x390] sm:$0xff]
        %v1000 = vld [vmem:[%s344 + $0x398] sm:$0xff]
        %v1001 = vld [vmem:[%s344 + $0x3a0] sm:$0xff]
        %v1002 = vld [vmem:[%s344 + $0x3a8] sm:$0xff]
        %v1003 = vld [vmem:[%s344 + $0x3b0] sm:$0xff]
        %v1004 = vld [vmem:[%s344 + $0x3b8] sm:$0xff]
        %v1005 = vld [vmem:[%s344 + $0x3c0] sm:$0xff]
        %v1006 = vld [vmem:[%s344 + $0x3c8] sm:$0xff]
        %v1007 = vld [vmem:[%s344 + $0x3d0] sm:$0xff]
        %v1008 = vld [vmem:[%s344 + $0x3d8] sm:$0xff]
        %v1009 = vld [vmem:[%s344 + $0x3e0] sm:$0xff]
        %v1010 = vld [vmem:[%s344 + $0x3e8] sm:$0xff]
        %v1011 = vld [vmem:[%s344 + $0x3f0] sm:$0xff]
        %v1012 = vld [vmem:[%s344 + $0x3f8] sm:$0xff]
        %v1013 = vld [vmem:[%s344 + $0x400] sm:$0xff]
        %v1014 = vld [vmem:[%s344 + $0x408] sm:$0xff]
        %v1015 = vld [vmem:[%s344 + $0x410] sm:$0xff]
        %v1016 = vld [vmem:[%s344 + $0x418] sm:$0xff]
        %v1017 = vld [vmem:[%s344 + $0x420] sm:$0xff]
        %v1018 = vld [vmem:[%s344 + $0x428] sm:$0xff]
        %v1019 = vld [vmem:[%s344 + $0x430] sm:$0xff]
        %v1020 = vld [vmem:[%s344 + $0x438] sm:$0xff]
        %v1021 = vld [vmem:[%s344 + $0x440] sm:$0xff]
        %v1022 = vld [vmem:[%s344 + $0x448] sm:$0xff]
        %v1023 = vld [vmem:[%s344 + $0x450] sm:$0xff]
        %v1024 = vld [vmem:[%s344 + $0x458] sm:$0xff]
        %v1025 = vld [vmem:[%s344 + $0x460] sm:$0xff]
        %v1026 = vld [vmem:[%s344 + $0x468] sm:$0xff]
        %v1027 = vld [vmem:[%s344 + $0x470] sm:$0xff]
        %v1028 = vld [vmem:[%s344 + $0x478] sm:$0xff]
        %v1029 = vld [vmem:[%s344 + $0x480] sm:$0xff]
        %v1030 = vld [vmem:[%s344 + $0x488] sm:$0xff]
        %v1031 = vld [vmem:[%s344 + $0x490] sm:$0xff]
        %v1032 = vld [vmem:[%s344 + $0x498] sm:$0xff]
        %v1033 = vld [vmem:[%s344 + $0x4a0] sm:$0xff]
        %v1034 = vld [vmem:[%s344 + $0x4a8] sm:$0xff]
        %v1035 = vld [vmem:[%s344 + $0x4b0] sm:$0xff]
        %v1036 = vld [vmem:[%s344 + $0x4b8] sm:$0xff]
        %v1037 = vld [vmem:[%s344 + $0x4c0] sm:$0xff]
        %v1038 = vld [vmem:[%s344 + $0x4c8] sm:$0xff]
        %v1039 = vld [vmem:[%s344 + $0x4d0] sm:$0xff]
        %v1040 = vld [vmem:[%s344 + $0x4d8] sm:$0xff]
        %v1041 = vld [vmem:[%s344 + $0x4e0] sm:$0xff]
        %v1042 = vld [vmem:[%s344 + $0x4e8] sm:$0xff]
        %v1043 = vld [vmem:[%s344 + $0x4f0] sm:$0xff]
        %v1044 = vld [vmem:[%s344 + $0x4f8] sm:$0xff]
        %v1045 = vld [vmem:[%s344 + $0x500] sm:$0xff]
        %v1046 = vld [vmem:[%s344 + $0x508] sm:$0xff]
        %v1047 = vld [vmem:[%s344 + $0x510] sm:$0xff]
        %v1048 = vld [vmem:[%s344 + $0x518] sm:$0xff]
        %v1049 = vld [vmem:[%s344 + $0x520] sm:$0xff]
        %v1050 = vld [vmem:[%s344 + $0x528] sm:$0xff]
        %v1051 = vld [vmem:[%s344 + $0x530] sm:$0xff]
        %v1052 = vld [vmem:[%s344 + $0x538] sm:$0xff]
        %v1053 = vld [vmem:[%s344 + $0x540] sm:$0xff]
        %v1054 = vld [vmem:[%s344 + $0x548] sm:$0xff]
        %v1055 = vld [vmem:[%s344 + $0x550] sm:$0xff]
        %v1056 = vld [vmem:[%s344 + $0x558] sm:$0xff]
        %v1057 = vld [vmem:[%s344 + $0x560] sm:$0xff]
        %v1058 = vld [vmem:[%s344 + $0x568] sm:$0xff]
        %v1059 = vld [vmem:[%s344 + $0x570] sm:$0xff]
        %v1060 = vld [vmem:[%s344 + $0x578] sm:$0xff]
        %v1061 = vld [vmem:[%s344 + $0x580] sm:$0xff]
        %v1062 = vld [vmem:[%s344 + $0x588] sm:$0xff]
        %v1063 = vld [vmem:[%s344 + $0x590] sm:$0xff]
        %v1064 = vld [vmem:[%s344 + $0x598] sm:$0xff]
        %v1065 = vld [vmem:[%s344 + $0x5a0] sm:$0xff]
        %v1066 = vld [vmem:[%s344 + $0x5a8] sm:$0xff]
        %v1067 = vld [vmem:[%s344 + $0x5b0] sm:$0xff]
        %v1068 = vld [vmem:[%s344 + $0x5b8] sm:$0xff]
        %v1069 = vld [vmem:[%s344 + $0x5c0] sm:$0xff]
        %v1070 = vld [vmem:[%s344 + $0x5c8] sm:$0xff]
        %v1071 = vld [vmem:[%s344 + $0x5d0] sm:$0xff]
        %v1072 = vld [vmem:[%s344 + $0x5d8] sm:$0xff]
        %v1073 = vld [vmem:[%s344 + $0x5e0] sm:$0xff]
        %v1074 = vld [vmem:[%s344 + $0x5e8] sm:$0xff]
        %v1075 = vld [vmem:[%s344 + $0x5f0] sm:$0xff]
        %v1076 = vld [vmem:[%s344 + $0x5f8] sm:$0xff]
        %v1077 = vld [vmem:[%s344 + $0x600] sm:$0xff]
        %v1078 = vld [vmem:[%s344 + $0x608] sm:$0xff]
        %v1079 = vld [vmem:[%s344 + $0x610] sm:$0xff]
        %v1080 = vld [vmem:[%s344 + $0x618] sm:$0xff]
        %v1081 = vld [vmem:[%s344 + $0x620] sm:$0xff]
        %v1082 = vld [vmem:[%s344 + $0x628] sm:$0xff]
        %v1083 = vld [vmem:[%s344 + $0x630] sm:$0xff]
        %v1084 = vld [vmem:[%s344 + $0x638] sm:$0xff]
        %v1085 = vld [vmem:[%s344 + $0x640] sm:$0xff]
        %v1086 = vld [vmem:[%s344 + $0x648] sm:$0xff]
        %v1087 = vld [vmem:[%s344 + $0x650] sm:$0xff]
        %v1088 = vld [vmem:[%s344 + $0x658] sm:$0xff]
        %v1089 = vld [vmem:[%s344 + $0x660] sm:$0xff]
        %v1090 = vld [vmem:[%s344 + $0x668] sm:$0xff]
        %v1091 = vld [vmem:[%s344 + $0x670] sm:$0xff]
        %v1092 = vld [vmem:[%s344 + $0x678] sm:$0xff]
        %v1093 = vld [vmem:[%s344 + $0x680] sm:$0xff]
        %v1094 = vld [vmem:[%s344 + $0x688] sm:$0xff]
        %v1095 = vld [vmem:[%s344 + $0x690] sm:$0xff]
        %v1096 = vld [vmem:[%s344 + $0x698] sm:$0xff]
        %v1097 = vld [vmem:[%s344 + $0x6a0] sm:$0xff]
        %v1098 = vld [vmem:[%s344 + $0x6a8] sm:$0xff]
        %v1099 = vld [vmem:[%s344 + $0x6b0] sm:$0xff]
        %v1100 = vld [vmem:[%s344 + $0x6b8] sm:$0xff]
        %v1101 = vld [vmem:[%s344 + $0x6c0] sm:$0xff]
        %v1102 = vld [vmem:[%s344 + $0x6c8] sm:$0xff]
        %v1103 = vld [vmem:[%s344 + $0x6d0] sm:$0xff]
        %v1104 = vld [vmem:[%s344 + $0x6d8] sm:$0xff]
        %v1105 = vld [vmem:[%s344 + $0x6e0] sm:$0xff]
        %v1106 = vld [vmem:[%s344 + $0x6e8] sm:$0xff]
        %v1107 = vld [vmem:[%s344 + $0x6f0] sm:$0xff]
        %v1108 = vld [vmem:[%s344 + $0x6f8] sm:$0xff]
        %v1109 = vld [vmem:[%s344 + $0x700] sm:$0xff]
        %v1110 = vld [vmem:[%s344 + $0x708] sm:$0xff]
        %v1111 = vld [vmem:[%s344 + $0x710] sm:$0xff]
        %v1112 = vld [vmem:[%s344 + $0x718] sm:$0xff]
        %v1113 = vld [vmem:[%s344 + $0x720] sm:$0xff]
        %v1114 = vld [vmem:[%s344 + $0x728] sm:$0xff]
        %v1115 = vld [vmem:[%s344 + $0x730] sm:$0xff]
        %v1116 = vld [vmem:[%s344 + $0x738] sm:$0xff]
        %v1117 = vld [vmem:[%s344 + $0x740] sm:$0xff]
        %v1118 = vld [vmem:[%s344 + $0x748] sm:$0xff]
        %v1119 = vld [vmem:[%s344 + $0x750] sm:$0xff]
        %v1120 = vld [vmem:[%s344 + $0x758] sm:$0xff]
        %v1121 = vld [vmem:[%s344 + $0x760] sm:$0xff]
        %v1122 = vld [vmem:[%s344 + $0x768] sm:$0xff]
        %v1123 = vld [vmem:[%s344 + $0x770] sm:$0xff]
        %v1124 = vld [vmem:[%s344 + $0x778] sm:$0xff]
        %v1125 = vld [vmem:[%s344 + $0x780] sm:$0xff]
        %v1126 = vld [vmem:[%s344 + $0x788] sm:$0xff]
        %v1127 = vld [vmem:[%s344 + $0x790] sm:$0xff]
        %v1128 = vld [vmem:[%s344 + $0x798] sm:$0xff]
        %v1129 = vld [vmem:[%s344 + $0x7a0] sm:$0xff]
        %v1130 = vld [vmem:[%s344 + $0x7a8] sm:$0xff]
        %v1131 = vld [vmem:[%s344 + $0x7b0] sm:$0xff]
        %v1132 = vld [vmem:[%s344 + $0x7b8] sm:$0xff]
        %v1133 = vld [vmem:[%s344 + $0x7c0] sm:$0xff]
        %v1134 = vld [vmem:[%s344 + $0x7c8] sm:$0xff]
        %v1135 = vld [vmem:[%s344 + $0x7d0] sm:$0xff]
        %v1136 = vld [vmem:[%s344 + $0x7d8] sm:$0xff]
        %v1137 = vld [vmem:[%s344 + $0x7e0] sm:$0xff]
        %v1138 = vld [vmem:[%s344 + $0x7e8] sm:$0xff]
        %v1139 = vld [vmem:[%s344 + $0x7f0] sm:$0xff]
        %v1140 = vld [vmem:[%s344 + $0x7f8] sm:$0xff]
        %v1141 = vld [vmem:[%s354] sm:$0xf]
        %v1143 = vperm.slane %v1141, 0
        %v1144 = vperm.slane %v1141, 1
        %v1145 = vperm.slane %v1141, 2
        %v1146 = vperm.slane %v1141, 3
        %v1407 = vunpack.c.l.b16 %v885
        %v1408 = vunpack.c.h.b16 %v885
        %v1409 = vunpack.c.l.b16 %v886
        %v1410 = vunpack.c.h.b16 %v886
        %v1411 = vunpack.c.l.b16 %v887
        %v1412 = vunpack.c.h.b16 %v887
        %v1413 = vunpack.c.l.b16 %v888
        %v1414 = vunpack.c.h.b16 %v888
        %v1415 = vunpack.c.l.b16 %v889
        %v1416 = vunpack.c.h.b16 %v889
        %v1417 = vunpack.c.l.b16 %v890
        %v1418 = vunpack.c.h.b16 %v890
        %v1419 = vunpack.c.l.b16 %v891
        %v1420 = vunpack.c.h.b16 %v891
        %v1421 = vunpack.c.l.b16 %v892
        %v1422 = vunpack.c.h.b16 %v892
        %v1423 = vunpack.c.l.b16 %v893
        %v1424 = vunpack.c.h.b16 %v893
        %v1425 = vunpack.c.l.b16 %v894
        %v1426 = vunpack.c.h.b16 %v894
        %v1427 = vunpack.c.l.b16 %v895
        %v1428 = vunpack.c.h.b16 %v895
        %v1429 = vunpack.c.l.b16 %v896
        %v1430 = vunpack.c.h.b16 %v896
        %v1431 = vunpack.c.l.b16 %v897
        %v1432 = vunpack.c.h.b16 %v897
        %v1433 = vunpack.c.l.b16 %v898
        %v1434 = vunpack.c.h.b16 %v898
        %v1435 = vunpack.c.l.b16 %v899
        %v1436 = vunpack.c.h.b16 %v899
        %v1437 = vunpack.c.l.b16 %v900
        %v1438 = vunpack.c.h.b16 %v900
        %v1439 = vunpack.c.l.b16 %v901
        %v1440 = vunpack.c.h.b16 %v901
        %v1441 = vunpack.c.l.b16 %v902
        %v1442 = vunpack.c.h.b16 %v902
        %v1443 = vunpack.c.l.b16 %v903
        %v1444 = vunpack.c.h.b16 %v903
        %v1445 = vunpack.c.l.b16 %v904
        %v1446 = vunpack.c.h.b16 %v904
        %v1447 = vunpack.c.l.b16 %v905
        %v1448 = vunpack.c.h.b16 %v905
        %v1449 = vunpack.c.l.b16 %v906
        %v1450 = vunpack.c.h.b16 %v906
        %v1451 = vunpack.c.l.b16 %v907
        %v1452 = vunpack.c.h.b16 %v907
        %v1453 = vunpack.c.l.b16 %v908
        %v1454 = vunpack.c.h.b16 %v908
        %v1455 = vunpack.c.l.b16 %v909
        %v1456 = vunpack.c.h.b16 %v909
        %v1457 = vunpack.c.l.b16 %v910
        %v1458 = vunpack.c.h.b16 %v910
        %v1459 = vunpack.c.l.b16 %v911
        %v1460 = vunpack.c.h.b16 %v911
        %v1461 = vunpack.c.l.b16 %v912
        %v1462 = vunpack.c.h.b16 %v912
        %v1463 = vunpack.c.l.b16 %v913
        %v1464 = vunpack.c.h.b16 %v913
        %v1465 = vunpack.c.l.b16 %v914
        %v1466 = vunpack.c.h.b16 %v914
        %v1467 = vunpack.c.l.b16 %v915
        %v1468 = vunpack.c.h.b16 %v915
        %v1469 = vunpack.c.l.b16 %v916
        %v1470 = vunpack.c.h.b16 %v916
        %v1471 = vunpack.c.l.b16 %v917
        %v1472 = vunpack.c.h.b16 %v917
        %v1473 = vunpack.c.l.b16 %v918
        %v1474 = vunpack.c.h.b16 %v918
        %v1475 = vunpack.c.l.b16 %v919
        %v1476 = vunpack.c.h.b16 %v919
        %v1477 = vunpack.c.l.b16 %v920
        %v1478 = vunpack.c.h.b16 %v920
        %v1479 = vunpack.c.l.b16 %v921
        %v1480 = vunpack.c.h.b16 %v921
        %v1481 = vunpack.c.l.b16 %v922
        %v1482 = vunpack.c.h.b16 %v922
        %v1483 = vunpack.c.l.b16 %v923
        %v1484 = vunpack.c.h.b16 %v923
        %v1485 = vunpack.c.l.b16 %v924
        %v1486 = vunpack.c.h.b16 %v924
        %v1487 = vunpack.c.l.b16 %v925
        %v1488 = vunpack.c.h.b16 %v925
        %v1489 = vunpack.c.l.b16 %v926
        %v1490 = vunpack.c.h.b16 %v926
        %v1491 = vunpack.c.l.b16 %v927
        %v1492 = vunpack.c.h.b16 %v927
        %v1493 = vunpack.c.l.b16 %v928
        %v1494 = vunpack.c.h.b16 %v928
        %v1495 = vunpack.c.l.b16 %v929
        %v1496 = vunpack.c.h.b16 %v929
        %v1497 = vunpack.c.l.b16 %v930
        %v1498 = vunpack.c.h.b16 %v930
        %v1499 = vunpack.c.l.b16 %v931
        %v1500 = vunpack.c.h.b16 %v931
        %v1501 = vunpack.c.l.b16 %v932
        %v1502 = vunpack.c.h.b16 %v932
        %v1503 = vunpack.c.l.b16 %v933
        %v1504 = vunpack.c.h.b16 %v933
        %v1505 = vunpack.c.l.b16 %v934
        %v1506 = vunpack.c.h.b16 %v934
        %v1507 = vunpack.c.l.b16 %v935
        %v1508 = vunpack.c.h.b16 %v935
        %v1509 = vunpack.c.l.b16 %v936
        %v1510 = vunpack.c.h.b16 %v936
        %v1511 = vunpack.c.l.b16 %v937
        %v1512 = vunpack.c.h.b16 %v937
        %v1513 = vunpack.c.l.b16 %v938
        %v1514 = vunpack.c.h.b16 %v938
        %v1515 = vunpack.c.l.b16 %v939
        %v1516 = vunpack.c.h.b16 %v939
        %v1517 = vunpack.c.l.b16 %v940
        %v1518 = vunpack.c.h.b16 %v940
        %v1519 = vunpack.c.l.b16 %v941
        %v1520 = vunpack.c.h.b16 %v941
        %v1521 = vunpack.c.l.b16 %v942
        %v1522 = vunpack.c.h.b16 %v942
        %v1523 = vunpack.c.l.b16 %v943
        %v1524 = vunpack.c.h.b16 %v943
        %v1525 = vunpack.c.l.b16 %v944
        %v1526 = vunpack.c.h.b16 %v944
        %v1527 = vunpack.c.l.b16 %v945
        %v1528 = vunpack.c.h.b16 %v945
        %v1529 = vunpack.c.l.b16 %v946
        %v1530 = vunpack.c.h.b16 %v946
        %v1531 = vunpack.c.l.b16 %v947
        %v1532 = vunpack.c.h.b16 %v947
        %v1533 = vunpack.c.l.b16 %v948
        %v1534 = vunpack.c.h.b16 %v948
        %v1535 = vunpack.c.l.b16 %v949
        %v1536 = vunpack.c.h.b16 %v949
        %v1537 = vunpack.c.l.b16 %v950
        %v1538 = vunpack.c.h.b16 %v950
        %v1539 = vunpack.c.l.b16 %v951
        %v1540 = vunpack.c.h.b16 %v951
        %v1541 = vunpack.c.l.b16 %v952
        %v1542 = vunpack.c.h.b16 %v952
        %v1543 = vunpack.c.l.b16 %v953
        %v1544 = vunpack.c.h.b16 %v953
        %v1545 = vunpack.c.l.b16 %v954
        %v1546 = vunpack.c.h.b16 %v954
        %v1547 = vunpack.c.l.b16 %v955
        %v1548 = vunpack.c.h.b16 %v955
        %v1549 = vunpack.c.l.b16 %v956
        %v1550 = vunpack.c.h.b16 %v956
        %v1551 = vunpack.c.l.b16 %v957
        %v1552 = vunpack.c.h.b16 %v957
        %v1553 = vunpack.c.l.b16 %v958
        %v1554 = vunpack.c.h.b16 %v958
        %v1555 = vunpack.c.l.b16 %v959
        %v1556 = vunpack.c.h.b16 %v959
        %v1557 = vunpack.c.l.b16 %v960
        %v1558 = vunpack.c.h.b16 %v960
        %v1559 = vunpack.c.l.b16 %v961
        %v1560 = vunpack.c.h.b16 %v961
        %v1561 = vunpack.c.l.b16 %v962
        %v1562 = vunpack.c.h.b16 %v962
        %v1563 = vunpack.c.l.b16 %v963
        %v1564 = vunpack.c.h.b16 %v963
        %v1565 = vunpack.c.l.b16 %v964
        %v1566 = vunpack.c.h.b16 %v964
        %v1567 = vunpack.c.l.b16 %v965
        %v1568 = vunpack.c.h.b16 %v965
        %v1569 = vunpack.c.l.b16 %v966
        %v1570 = vunpack.c.h.b16 %v966
        %v1571 = vunpack.c.l.b16 %v967
        %v1572 = vunpack.c.h.b16 %v967
        %v1573 = vunpack.c.l.b16 %v968
        %v1574 = vunpack.c.h.b16 %v968
        %v1575 = vunpack.c.l.b16 %v969
        %v1576 = vunpack.c.h.b16 %v969
        %v1577 = vunpack.c.l.b16 %v970
        %v1578 = vunpack.c.h.b16 %v970
        %v1579 = vunpack.c.l.b16 %v971
        %v1580 = vunpack.c.h.b16 %v971
        %v1581 = vunpack.c.l.b16 %v972
        %v1582 = vunpack.c.h.b16 %v972
        %v1583 = vunpack.c.l.b16 %v973
        %v1584 = vunpack.c.h.b16 %v973
        %v1585 = vunpack.c.l.b16 %v974
        %v1586 = vunpack.c.h.b16 %v974
        %v1587 = vunpack.c.l.b16 %v975
        %v1588 = vunpack.c.h.b16 %v975
        %v1589 = vunpack.c.l.b16 %v976
        %v1590 = vunpack.c.h.b16 %v976
        %v1591 = vunpack.c.l.b16 %v977
        %v1592 = vunpack.c.h.b16 %v977
        %v1593 = vunpack.c.l.b16 %v978
        %v1594 = vunpack.c.h.b16 %v978
        %v1595 = vunpack.c.l.b16 %v979
        %v1596 = vunpack.c.h.b16 %v979
        %v1597 = vunpack.c.l.b16 %v980
        %v1598 = vunpack.c.h.b16 %v980
        %v1599 = vunpack.c.l.b16 %v981
        %v1600 = vunpack.c.h.b16 %v981
        %v1601 = vunpack.c.l.b16 %v982
        %v1602 = vunpack.c.h.b16 %v982
        %v1603 = vunpack.c.l.b16 %v983
        %v1604 = vunpack.c.h.b16 %v983
        %v1605 = vunpack.c.l.b16 %v984
        %v1606 = vunpack.c.h.b16 %v984
        %v1607 = vunpack.c.l.b16 %v985
        %v1608 = vunpack.c.h.b16 %v985
        %v1609 = vunpack.c.l.b16 %v986
        %v1610 = vunpack.c.h.b16 %v986
        %v1611 = vunpack.c.l.b16 %v987
        %v1612 = vunpack.c.h.b16 %v987
        %v1613 = vunpack.c.l.b16 %v988
        %v1614 = vunpack.c.h.b16 %v988
        %v1615 = vunpack.c.l.b16 %v989
        %v1616 = vunpack.c.h.b16 %v989
        %v1617 = vunpack.c.l.b16 %v990
        %v1618 = vunpack.c.h.b16 %v990
        %v1619 = vunpack.c.l.b16 %v991
        %v1620 = vunpack.c.h.b16 %v991
        %v1621 = vunpack.c.l.b16 %v992
        %v1622 = vunpack.c.h.b16 %v992
        %v1623 = vunpack.c.l.b16 %v993
        %v1624 = vunpack.c.h.b16 %v993
        %v1625 = vunpack.c.l.b16 %v994
        %v1626 = vunpack.c.h.b16 %v994
        %v1627 = vunpack.c.l.b16 %v995
        %v1628 = vunpack.c.h.b16 %v995
        %v1629 = vunpack.c.l.b16 %v996
        %v1630 = vunpack.c.h.b16 %v996
        %v1631 = vunpack.c.l.b16 %v997
        %v1632 = vunpack.c.h.b16 %v997
        %v1633 = vunpack.c.l.b16 %v998
        %v1634 = vunpack.c.h.b16 %v998
        %v1635 = vunpack.c.l.b16 %v999
        %v1636 = vunpack.c.h.b16 %v999
        %v1637 = vunpack.c.l.b16 %v1000
        %v1638 = vunpack.c.h.b16 %v1000
        %v1639 = vunpack.c.l.b16 %v1001
        %v1640 = vunpack.c.h.b16 %v1001
        %v1641 = vunpack.c.l.b16 %v1002
        %v1642 = vunpack.c.h.b16 %v1002
        %v1643 = vunpack.c.l.b16 %v1003
        %v1644 = vunpack.c.h.b16 %v1003
        %v1645 = vunpack.c.l.b16 %v1004
        %v1646 = vunpack.c.h.b16 %v1004
        %v1647 = vunpack.c.l.b16 %v1005
        %v1648 = vunpack.c.h.b16 %v1005
        %v1649 = vunpack.c.l.b16 %v1006
        %v1650 = vunpack.c.h.b16 %v1006
        %v1651 = vunpack.c.l.b16 %v1007
        %v1652 = vunpack.c.h.b16 %v1007
        %v1653 = vunpack.c.l.b16 %v1008
        %v1654 = vunpack.c.h.b16 %v1008
        %v1655 = vunpack.c.l.b16 %v1009
        %v1656 = vunpack.c.h.b16 %v1009
        %v1657 = vunpack.c.l.b16 %v1010
        %v1658 = vunpack.c.h.b16 %v1010
        %v1659 = vunpack.c.l.b16 %v1011
        %v1660 = vunpack.c.h.b16 %v1011
        %v1661 = vunpack.c.l.b16 %v1012
        %v1662 = vunpack.c.h.b16 %v1012
        %v1663 = vunpack.c.l.b16 %v1013
        %v1664 = vunpack.c.h.b16 %v1013
        %v1665 = vunpack.c.l.b16 %v1014
        %v1666 = vunpack.c.h.b16 %v1014
        %v1667 = vunpack.c.l.b16 %v1015
        %v1668 = vunpack.c.h.b16 %v1015
        %v1669 = vunpack.c.l.b16 %v1016
        %v1670 = vunpack.c.h.b16 %v1016
        %v1671 = vunpack.c.l.b16 %v1017
        %v1672 = vunpack.c.h.b16 %v1017
        %v1673 = vunpack.c.l.b16 %v1018
        %v1674 = vunpack.c.h.b16 %v1018
        %v1675 = vunpack.c.l.b16 %v1019
        %v1676 = vunpack.c.h.b16 %v1019
        %v1677 = vunpack.c.l.b16 %v1020
        %v1678 = vunpack.c.h.b16 %v1020
        %v1679 = vunpack.c.l.b16 %v1021
        %v1680 = vunpack.c.h.b16 %v1021
        %v1681 = vunpack.c.l.b16 %v1022
        %v1682 = vunpack.c.h.b16 %v1022
        %v1683 = vunpack.c.l.b16 %v1023
        %v1684 = vunpack.c.h.b16 %v1023
        %v1685 = vunpack.c.l.b16 %v1024
        %v1686 = vunpack.c.h.b16 %v1024
        %v1687 = vunpack.c.l.b16 %v1025
        %v1688 = vunpack.c.h.b16 %v1025
        %v1689 = vunpack.c.l.b16 %v1026
        %v1690 = vunpack.c.h.b16 %v1026
        %v1691 = vunpack.c.l.b16 %v1027
        %v1692 = vunpack.c.h.b16 %v1027
        %v1693 = vunpack.c.l.b16 %v1028
        %v1694 = vunpack.c.h.b16 %v1028
        %v1695 = vunpack.c.l.b16 %v1029
        %v1696 = vunpack.c.h.b16 %v1029
        %v1697 = vunpack.c.l.b16 %v1030
        %v1698 = vunpack.c.h.b16 %v1030
        %v1699 = vunpack.c.l.b16 %v1031
        %v1700 = vunpack.c.h.b16 %v1031
        %v1701 = vunpack.c.l.b16 %v1032
        %v1702 = vunpack.c.h.b16 %v1032
        %v1703 = vunpack.c.l.b16 %v1033
        %v1704 = vunpack.c.h.b16 %v1033
        %v1705 = vunpack.c.l.b16 %v1034
        %v1706 = vunpack.c.h.b16 %v1034
        %v1707 = vunpack.c.l.b16 %v1035
        %v1708 = vunpack.c.h.b16 %v1035
        %v1709 = vunpack.c.l.b16 %v1036
        %v1710 = vunpack.c.h.b16 %v1036
        %v1711 = vunpack.c.l.b16 %v1037
        %v1712 = vunpack.c.h.b16 %v1037
        %v1713 = vunpack.c.l.b16 %v1038
        %v1714 = vunpack.c.h.b16 %v1038
        %v1715 = vunpack.c.l.b16 %v1039
        %v1716 = vunpack.c.h.b16 %v1039
        %v1717 = vunpack.c.l.b16 %v1040
        %v1718 = vunpack.c.h.b16 %v1040
        %v1719 = vunpack.c.l.b16 %v1041
        %v1720 = vunpack.c.h.b16 %v1041
        %v1721 = vunpack.c.l.b16 %v1042
        %v1722 = vunpack.c.h.b16 %v1042
        %v1723 = vunpack.c.l.b16 %v1043
        %v1724 = vunpack.c.h.b16 %v1043
        %v1725 = vunpack.c.l.b16 %v1044
        %v1726 = vunpack.c.h.b16 %v1044
        %v1727 = vunpack.c.l.b16 %v1045
        %v1728 = vunpack.c.h.b16 %v1045
        %v1729 = vunpack.c.l.b16 %v1046
        %v1730 = vunpack.c.h.b16 %v1046
        %v1731 = vunpack.c.l.b16 %v1047
        %v1732 = vunpack.c.h.b16 %v1047
        %v1733 = vunpack.c.l.b16 %v1048
        %v1734 = vunpack.c.h.b16 %v1048
        %v1735 = vunpack.c.l.b16 %v1049
        %v1736 = vunpack.c.h.b16 %v1049
        %v1737 = vunpack.c.l.b16 %v1050
        %v1738 = vunpack.c.h.b16 %v1050
        %v1739 = vunpack.c.l.b16 %v1051
        %v1740 = vunpack.c.h.b16 %v1051
        %v1741 = vunpack.c.l.b16 %v1052
        %v1742 = vunpack.c.h.b16 %v1052
        %v1743 = vunpack.c.l.b16 %v1053
        %v1744 = vunpack.c.h.b16 %v1053
        %v1745 = vunpack.c.l.b16 %v1054
        %v1746 = vunpack.c.h.b16 %v1054
        %v1747 = vunpack.c.l.b16 %v1055
        %v1748 = vunpack.c.h.b16 %v1055
        %v1749 = vunpack.c.l.b16 %v1056
        %v1750 = vunpack.c.h.b16 %v1056
        %v1751 = vunpack.c.l.b16 %v1057
        %v1752 = vunpack.c.h.b16 %v1057
        %v1753 = vunpack.c.l.b16 %v1058
        %v1754 = vunpack.c.h.b16 %v1058
        %v1755 = vunpack.c.l.b16 %v1059
        %v1756 = vunpack.c.h.b16 %v1059
        %v1757 = vunpack.c.l.b16 %v1060
        %v1758 = vunpack.c.h.b16 %v1060
        %v1759 = vunpack.c.l.b16 %v1061
        %v1760 = vunpack.c.h.b16 %v1061
        %v1761 = vunpack.c.l.b16 %v1062
        %v1762 = vunpack.c.h.b16 %v1062
        %v1763 = vunpack.c.l.b16 %v1063
        %v1764 = vunpack.c.h.b16 %v1063
        %v1765 = vunpack.c.l.b16 %v1064
        %v1766 = vunpack.c.h.b16 %v1064
        %v1767 = vunpack.c.l.b16 %v1065
        %v1768 = vunpack.c.h.b16 %v1065
        %v1769 = vunpack.c.l.b16 %v1066
        %v1770 = vunpack.c.h.b16 %v1066
        %v1771 = vunpack.c.l.b16 %v1067
        %v1772 = vunpack.c.h.b16 %v1067
        %v1773 = vunpack.c.l.b16 %v1068
        %v1774 = vunpack.c.h.b16 %v1068
        %v1775 = vunpack.c.l.b16 %v1069
        %v1776 = vunpack.c.h.b16 %v1069
        %v1777 = vunpack.c.l.b16 %v1070
        %v1778 = vunpack.c.h.b16 %v1070
        %v1779 = vunpack.c.l.b16 %v1071
        %v1780 = vunpack.c.h.b16 %v1071
        %v1781 = vunpack.c.l.b16 %v1072
        %v1782 = vunpack.c.h.b16 %v1072
        %v1783 = vunpack.c.l.b16 %v1073
        %v1784 = vunpack.c.h.b16 %v1073
        %v1785 = vunpack.c.l.b16 %v1074
        %v1786 = vunpack.c.h.b16 %v1074
        %v1787 = vunpack.c.l.b16 %v1075
        %v1788 = vunpack.c.h.b16 %v1075
        %v1789 = vunpack.c.l.b16 %v1076
        %v1790 = vunpack.c.h.b16 %v1076
        %v1791 = vunpack.c.l.b16 %v1077
        %v1792 = vunpack.c.h.b16 %v1077
        %v1793 = vunpack.c.l.b16 %v1078
        %v1794 = vunpack.c.h.b16 %v1078
        %v1795 = vunpack.c.l.b16 %v1079
        %v1796 = vunpack.c.h.b16 %v1079
        %v1797 = vunpack.c.l.b16 %v1080
        %v1798 = vunpack.c.h.b16 %v1080
        %v1799 = vunpack.c.l.b16 %v1081
        %v1800 = vunpack.c.h.b16 %v1081
        %v1801 = vunpack.c.l.b16 %v1082
        %v1802 = vunpack.c.h.b16 %v1082
        %v1803 = vunpack.c.l.b16 %v1083
        %v1804 = vunpack.c.h.b16 %v1083
        %v1805 = vunpack.c.l.b16 %v1084
        %v1806 = vunpack.c.h.b16 %v1084
        %v1807 = vunpack.c.l.b16 %v1085
        %v1808 = vunpack.c.h.b16 %v1085
        %v1809 = vunpack.c.l.b16 %v1086
        %v1810 = vunpack.c.h.b16 %v1086
        %v1811 = vunpack.c.l.b16 %v1087
        %v1812 = vunpack.c.h.b16 %v1087
        %v1813 = vunpack.c.l.b16 %v1088
        %v1814 = vunpack.c.h.b16 %v1088
        %v1815 = vunpack.c.l.b16 %v1089
        %v1816 = vunpack.c.h.b16 %v1089
        %v1817 = vunpack.c.l.b16 %v1090
        %v1818 = vunpack.c.h.b16 %v1090
        %v1819 = vunpack.c.l.b16 %v1091
        %v1820 = vunpack.c.h.b16 %v1091
        %v1821 = vunpack.c.l.b16 %v1092
        %v1822 = vunpack.c.h.b16 %v1092
        %v1823 = vunpack.c.l.b16 %v1093
        %v1824 = vunpack.c.h.b16 %v1093
        %v1825 = vunpack.c.l.b16 %v1094
        %v1826 = vunpack.c.h.b16 %v1094
        %v1827 = vunpack.c.l.b16 %v1095
        %v1828 = vunpack.c.h.b16 %v1095
        %v1829 = vunpack.c.l.b16 %v1096
        %v1830 = vunpack.c.h.b16 %v1096
        %v1831 = vunpack.c.l.b16 %v1097
        %v1832 = vunpack.c.h.b16 %v1097
        %v1833 = vunpack.c.l.b16 %v1098
        %v1834 = vunpack.c.h.b16 %v1098
        %v1835 = vunpack.c.l.b16 %v1099
        %v1836 = vunpack.c.h.b16 %v1099
        %v1837 = vunpack.c.l.b16 %v1100
        %v1838 = vunpack.c.h.b16 %v1100
        %v1839 = vunpack.c.l.b16 %v1101
        %v1840 = vunpack.c.h.b16 %v1101
        %v1841 = vunpack.c.l.b16 %v1102
        %v1842 = vunpack.c.h.b16 %v1102
        %v1843 = vunpack.c.l.b16 %v1103
        %v1844 = vunpack.c.h.b16 %v1103
        %v1845 = vunpack.c.l.b16 %v1104
        %v1846 = vunpack.c.h.b16 %v1104
        %v1847 = vunpack.c.l.b16 %v1105
        %v1848 = vunpack.c.h.b16 %v1105
        %v1849 = vunpack.c.l.b16 %v1106
        %v1850 = vunpack.c.h.b16 %v1106
        %v1851 = vunpack.c.l.b16 %v1107
        %v1852 = vunpack.c.h.b16 %v1107
        %v1853 = vunpack.c.l.b16 %v1108
        %v1854 = vunpack.c.h.b16 %v1108
        %v1855 = vunpack.c.l.b16 %v1109
        %v1856 = vunpack.c.h.b16 %v1109
        %v1857 = vunpack.c.l.b16 %v1110
        %v1858 = vunpack.c.h.b16 %v1110
        %v1859 = vunpack.c.l.b16 %v1111
        %v1860 = vunpack.c.h.b16 %v1111
        %v1861 = vunpack.c.l.b16 %v1112
        %v1862 = vunpack.c.h.b16 %v1112
        %v1863 = vunpack.c.l.b16 %v1113
        %v1864 = vunpack.c.h.b16 %v1113
        %v1865 = vunpack.c.l.b16 %v1114
        %v1866 = vunpack.c.h.b16 %v1114
        %v1867 = vunpack.c.l.b16 %v1115
        %v1868 = vunpack.c.h.b16 %v1115
        %v1869 = vunpack.c.l.b16 %v1116
        %v1870 = vunpack.c.h.b16 %v1116
        %v1871 = vunpack.c.l.b16 %v1117
        %v1872 = vunpack.c.h.b16 %v1117
        %v1873 = vunpack.c.l.b16 %v1118
        %v1874 = vunpack.c.h.b16 %v1118
        %v1875 = vunpack.c.l.b16 %v1119
        %v1876 = vunpack.c.h.b16 %v1119
        %v1877 = vunpack.c.l.b16 %v1120
        %v1878 = vunpack.c.h.b16 %v1120
        %v1879 = vunpack.c.l.b16 %v1121
        %v1880 = vunpack.c.h.b16 %v1121
        %v1881 = vunpack.c.l.b16 %v1122
        %v1882 = vunpack.c.h.b16 %v1122
        %v1883 = vunpack.c.l.b16 %v1123
        %v1884 = vunpack.c.h.b16 %v1123
        %v1885 = vunpack.c.l.b16 %v1124
        %v1886 = vunpack.c.h.b16 %v1124
        %v1887 = vunpack.c.l.b16 %v1125
        %v1888 = vunpack.c.h.b16 %v1125
        %v1889 = vunpack.c.l.b16 %v1126
        %v1890 = vunpack.c.h.b16 %v1126
        %v1891 = vunpack.c.l.b16 %v1127
        %v1892 = vunpack.c.h.b16 %v1127
        %v1893 = vunpack.c.l.b16 %v1128
        %v1894 = vunpack.c.h.b16 %v1128
        %v1895 = vunpack.c.l.b16 %v1129
        %v1896 = vunpack.c.h.b16 %v1129
        %v1897 = vunpack.c.l.b16 %v1130
        %v1898 = vunpack.c.h.b16 %v1130
        %v1899 = vunpack.c.l.b16 %v1131
        %v1900 = vunpack.c.h.b16 %v1131
        %v1901 = vunpack.c.l.b16 %v1132
        %v1902 = vunpack.c.h.b16 %v1132
        %v1903 = vunpack.c.l.b16 %v1133
        %v1904 = vunpack.c.h.b16 %v1133
        %v1905 = vunpack.c.l.b16 %v1134
        %v1906 = vunpack.c.h.b16 %v1134
        %v1907 = vunpack.c.l.b16 %v1135
        %v1908 = vunpack.c.h.b16 %v1135
        %v1909 = vunpack.c.l.b16 %v1136
        %v1910 = vunpack.c.h.b16 %v1136
        %v1911 = vunpack.c.l.b16 %v1137
        %v1912 = vunpack.c.h.b16 %v1137
        %v1913 = vunpack.c.l.b16 %v1138
        %v1914 = vunpack.c.h.b16 %v1138
        %v1915 = vunpack.c.l.b16 %v1139
        %v1916 = vunpack.c.h.b16 %v1139
        %v1917 = vunpack.c.l.b16 %v1140
        %v1918 = vunpack.c.h.b16 %v1140
        %v1919 = vpack.c.b16 %v1411, %v1407
        %v1920 = vpack.c.b16 %v1412, %v1408
        %v1921 = vpack.c.b16 %v1413, %v1409
        %v1922 = vpack.c.b16 %v1414, %v1410
        %v1923 = vpack.c.b16 %v1419, %v1415
        %v1924 = vpack.c.b16 %v1420, %v1416
        %v1925 = vpack.c.b16 %v1421, %v1417
        %v1926 = vpack.c.b16 %v1422, %v1418
        %v1927 = vpack.c.b16 %v1427, %v1423
        %v1928 = vpack.c.b16 %v1428, %v1424
        %v1929 = vpack.c.b16 %v1429, %v1425
        %v1930 = vpack.c.b16 %v1430, %v1426
        %v1931 = vpack.c.b16 %v1435, %v1431
        %v1932 = vpack.c.b16 %v1436, %v1432
        %v1933 = vpack.c.b16 %v1437, %v1433
        %v1934 = vpack.c.b16 %v1438, %v1434
        %v1935 = vpack.c.b16 %v1443, %v1439
        %v1936 = vpack.c.b16 %v1444, %v1440
        %v1937 = vpack.c.b16 %v1445, %v1441
        %v1938 = vpack.c.b16 %v1446, %v1442
        %v1939 = vpack.c.b16 %v1451, %v1447
        %v1940 = vpack.c.b16 %v1452, %v1448
        %v1941 = vpack.c.b16 %v1453, %v1449
        %v1942 = vpack.c.b16 %v1454, %v1450
        %v1943 = vpack.c.b16 %v1459, %v1455
        %v1944 = vpack.c.b16 %v1460, %v1456
        %v1945 = vpack.c.b16 %v1461, %v1457
        %v1946 = vpack.c.b16 %v1462, %v1458
        %v1947 = vpack.c.b16 %v1467, %v1463
        %v1948 = vpack.c.b16 %v1468, %v1464
        %v1949 = vpack.c.b16 %v1469, %v1465
        %v1950 = vpack.c.b16 %v1470, %v1466
        %v1951 = vpack.c.b16 %v1475, %v1471
        %v1952 = vpack.c.b16 %v1476, %v1472
        %v1953 = vpack.c.b16 %v1477, %v1473
        %v1954 = vpack.c.b16 %v1478, %v1474
        %v1955 = vpack.c.b16 %v1483, %v1479
        %v1956 = vpack.c.b16 %v1484, %v1480
        %v1957 = vpack.c.b16 %v1485, %v1481
        %v1958 = vpack.c.b16 %v1486, %v1482
        %v1959 = vpack.c.b16 %v1491, %v1487
        %v1960 = vpack.c.b16 %v1492, %v1488
        %v1961 = vpack.c.b16 %v1493, %v1489
        %v1962 = vpack.c.b16 %v1494, %v1490
        %v1963 = vpack.c.b16 %v1499, %v1495
        %v1964 = vpack.c.b16 %v1500, %v1496
        %v1965 = vpack.c.b16 %v1501, %v1497
        %v1966 = vpack.c.b16 %v1502, %v1498
        %v1967 = vpack.c.b16 %v1507, %v1503
        %v1968 = vpack.c.b16 %v1508, %v1504
        %v1969 = vpack.c.b16 %v1509, %v1505
        %v1970 = vpack.c.b16 %v1510, %v1506
        %v1971 = vpack.c.b16 %v1515, %v1511
        %v1972 = vpack.c.b16 %v1516, %v1512
        %v1973 = vpack.c.b16 %v1517, %v1513
        %v1974 = vpack.c.b16 %v1518, %v1514
        %v1975 = vpack.c.b16 %v1523, %v1519
        %v1976 = vpack.c.b16 %v1524, %v1520
        %v1977 = vpack.c.b16 %v1525, %v1521
        %v1978 = vpack.c.b16 %v1526, %v1522
        %v1979 = vpack.c.b16 %v1531, %v1527
        %v1980 = vpack.c.b16 %v1532, %v1528
        %v1981 = vpack.c.b16 %v1533, %v1529
        %v1982 = vpack.c.b16 %v1534, %v1530
        %v1983 = vpack.c.b16 %v1539, %v1535
        %v1984 = vpack.c.b16 %v1540, %v1536
        %v1985 = vpack.c.b16 %v1541, %v1537
        %v1986 = vpack.c.b16 %v1542, %v1538
        %v1987 = vpack.c.b16 %v1547, %v1543
        %v1988 = vpack.c.b16 %v1548, %v1544
        %v1989 = vpack.c.b16 %v1549, %v1545
        %v1990 = vpack.c.b16 %v1550, %v1546
        %v1991 = vpack.c.b16 %v1555, %v1551
        %v1992 = vpack.c.b16 %v1556, %v1552
        %v1993 = vpack.c.b16 %v1557, %v1553
        %v1994 = vpack.c.b16 %v1558, %v1554
        %v1995 = vpack.c.b16 %v1563, %v1559
        %v1996 = vpack.c.b16 %v1564, %v1560
        %v1997 = vpack.c.b16 %v1565, %v1561
        %v1998 = vpack.c.b16 %v1566, %v1562
        %v1999 = vpack.c.b16 %v1571, %v1567
        %v2000 = vpack.c.b16 %v1572, %v1568
        %v2001 = vpack.c.b16 %v1573, %v1569
        %v2002 = vpack.c.b16 %v1574, %v1570
        %v2003 = vpack.c.b16 %v1579, %v1575
        %v2004 = vpack.c.b16 %v1580, %v1576
        %v2005 = vpack.c.b16 %v1581, %v1577
        %v2006 = vpack.c.b16 %v1582, %v1578
        %v2007 = vpack.c.b16 %v1587, %v1583
        %v2008 = vpack.c.b16 %v1588, %v1584
        %v2009 = vpack.c.b16 %v1589, %v1585
        %v2010 = vpack.c.b16 %v1590, %v1586
        %v2011 = vpack.c.b16 %v1595, %v1591
        %v2012 = vpack.c.b16 %v1596, %v1592
        %v2013 = vpack.c.b16 %v1597, %v1593
        %v2014 = vpack.c.b16 %v1598, %v1594
        %v2015 = vpack.c.b16 %v1603, %v1599
        %v2016 = vpack.c.b16 %v1604, %v1600
        %v2017 = vpack.c.b16 %v1605, %v1601
        %v2018 = vpack.c.b16 %v1606, %v1602
        %v2019 = vpack.c.b16 %v1611, %v1607
        %v2020 = vpack.c.b16 %v1612, %v1608
        %v2021 = vpack.c.b16 %v1613, %v1609
        %v2022 = vpack.c.b16 %v1614, %v1610
        %v2023 = vpack.c.b16 %v1619, %v1615
        %v2024 = vpack.c.b16 %v1620, %v1616
        %v2025 = vpack.c.b16 %v1621, %v1617
        %v2026 = vpack.c.b16 %v1622, %v1618
        %v2027 = vpack.c.b16 %v1627, %v1623
        %v2028 = vpack.c.b16 %v1628, %v1624
        %v2029 = vpack.c.b16 %v1629, %v1625
        %v2030 = vpack.c.b16 %v1630, %v1626
        %v2031 = vpack.c.b16 %v1635, %v1631
        %v2032 = vpack.c.b16 %v1636, %v1632
        %v2033 = vpack.c.b16 %v1637, %v1633
        %v2034 = vpack.c.b16 %v1638, %v1634
        %v2035 = vpack.c.b16 %v1643, %v1639
        %v2036 = vpack.c.b16 %v1644, %v1640
        %v2037 = vpack.c.b16 %v1645, %v1641
        %v2038 = vpack.c.b16 %v1646, %v1642
        %v2039 = vpack.c.b16 %v1651, %v1647
        %v2040 = vpack.c.b16 %v1652, %v1648
        %v2041 = vpack.c.b16 %v1653, %v1649
        %v2042 = vpack.c.b16 %v1654, %v1650
        %v2043 = vpack.c.b16 %v1659, %v1655
        %v2044 = vpack.c.b16 %v1660, %v1656
        %v2045 = vpack.c.b16 %v1661, %v1657
        %v2046 = vpack.c.b16 %v1662, %v1658
        %v2047 = vpack.c.b16 %v1667, %v1663
        %v2048 = vpack.c.b16 %v1668, %v1664
        %v2049 = vpack.c.b16 %v1669, %v1665
        %v2050 = vpack.c.b16 %v1670, %v1666
        %v2051 = vpack.c.b16 %v1675, %v1671
        %v2052 = vpack.c.b16 %v1676, %v1672
        %v2053 = vpack.c.b16 %v1677, %v1673
        %v2054 = vpack.c.b16 %v1678, %v1674
        %v2055 = vpack.c.b16 %v1683, %v1679
        %v2056 = vpack.c.b16 %v1684, %v1680
        %v2057 = vpack.c.b16 %v1685, %v1681
        %v2058 = vpack.c.b16 %v1686, %v1682
        %v2059 = vpack.c.b16 %v1691, %v1687
        %v2060 = vpack.c.b16 %v1692, %v1688
        %v2061 = vpack.c.b16 %v1693, %v1689
        %v2062 = vpack.c.b16 %v1694, %v1690
        %v2063 = vpack.c.b16 %v1699, %v1695
        %v2064 = vpack.c.b16 %v1700, %v1696
        %v2065 = vpack.c.b16 %v1701, %v1697
        %v2066 = vpack.c.b16 %v1702, %v1698
        %v2067 = vpack.c.b16 %v1707, %v1703
        %v2068 = vpack.c.b16 %v1708, %v1704
        %v2069 = vpack.c.b16 %v1709, %v1705
        %v2070 = vpack.c.b16 %v1710, %v1706
        %v2071 = vpack.c.b16 %v1715, %v1711
        %v2072 = vpack.c.b16 %v1716, %v1712
        %v2073 = vpack.c.b16 %v1717, %v1713
        %v2074 = vpack.c.b16 %v1718, %v1714
        %v2075 = vpack.c.b16 %v1723, %v1719
        %v2076 = vpack.c.b16 %v1724, %v1720
        %v2077 = vpack.c.b16 %v1725, %v1721
        %v2078 = vpack.c.b16 %v1726, %v1722
        %v2079 = vpack.c.b16 %v1731, %v1727
        %v2080 = vpack.c.b16 %v1732, %v1728
        %v2081 = vpack.c.b16 %v1733, %v1729
        %v2082 = vpack.c.b16 %v1734, %v1730
        %v2083 = vpack.c.b16 %v1739, %v1735
        %v2084 = vpack.c.b16 %v1740, %v1736
        %v2085 = vpack.c.b16 %v1741, %v1737
        %v2086 = vpack.c.b16 %v1742, %v1738
        %v2087 = vpack.c.b16 %v1747, %v1743
        %v2088 = vpack.c.b16 %v1748, %v1744
        %v2089 = vpack.c.b16 %v1749, %v1745
        %v2090 = vpack.c.b16 %v1750, %v1746
        %v2091 = vpack.c.b16 %v1755, %v1751
        %v2092 = vpack.c.b16 %v1756, %v1752
        %v2093 = vpack.c.b16 %v1757, %v1753
        %v2094 = vpack.c.b16 %v1758, %v1754
        %v2095 = vpack.c.b16 %v1763, %v1759
        %v2096 = vpack.c.b16 %v1764, %v1760
        %v2097 = vpack.c.b16 %v1765, %v1761
        %v2098 = vpack.c.b16 %v1766, %v1762
        %v2099 = vpack.c.b16 %v1771, %v1767
        %v2100 = vpack.c.b16 %v1772, %v1768
        %v2101 = vpack.c.b16 %v1773, %v1769
        %v2102 = vpack.c.b16 %v1774, %v1770
        %v2103 = vpack.c.b16 %v1779, %v1775
        %v2104 = vpack.c.b16 %v1780, %v1776
        %v2105 = vpack.c.b16 %v1781, %v1777
        %v2106 = vpack.c.b16 %v1782, %v1778
        %v2107 = vpack.c.b16 %v1787, %v1783
        %v2108 = vpack.c.b16 %v1788, %v1784
        %v2109 = vpack.c.b16 %v1789, %v1785
        %v2110 = vpack.c.b16 %v1790, %v1786
        %v2111 = vpack.c.b16 %v1795, %v1791
        %v2112 = vpack.c.b16 %v1796, %v1792
        %v2113 = vpack.c.b16 %v1797, %v1793
        %v2114 = vpack.c.b16 %v1798, %v1794
        %v2115 = vpack.c.b16 %v1803, %v1799
        %v2116 = vpack.c.b16 %v1804, %v1800
        %v2117 = vpack.c.b16 %v1805, %v1801
        %v2118 = vpack.c.b16 %v1806, %v1802
        %v2119 = vpack.c.b16 %v1811, %v1807
        %v2120 = vpack.c.b16 %v1812, %v1808
        %v2121 = vpack.c.b16 %v1813, %v1809
        %v2122 = vpack.c.b16 %v1814, %v1810
        %v2123 = vpack.c.b16 %v1819, %v1815
        %v2124 = vpack.c.b16 %v1820, %v1816
        %v2125 = vpack.c.b16 %v1821, %v1817
        %v2126 = vpack.c.b16 %v1822, %v1818
        %v2127 = vpack.c.b16 %v1827, %v1823
        %v2128 = vpack.c.b16 %v1828, %v1824
        %v2129 = vpack.c.b16 %v1829, %v1825
        %v2130 = vpack.c.b16 %v1830, %v1826
        %v2131 = vpack.c.b16 %v1835, %v1831
        %v2132 = vpack.c.b16 %v1836, %v1832
        %v2133 = vpack.c.b16 %v1837, %v1833
        %v2134 = vpack.c.b16 %v1838, %v1834
        %v2135 = vpack.c.b16 %v1843, %v1839
        %v2136 = vpack.c.b16 %v1844, %v1840
        %v2137 = vpack.c.b16 %v1845, %v1841
        %v2138 = vpack.c.b16 %v1846, %v1842
        %v2139 = vpack.c.b16 %v1851, %v1847
        %v2140 = vpack.c.b16 %v1852, %v1848
        %v2141 = vpack.c.b16 %v1853, %v1849
        %v2142 = vpack.c.b16 %v1854, %v1850
        %v2143 = vpack.c.b16 %v1859, %v1855
        %v2144 = vpack.c.b16 %v1860, %v1856
        %v2145 = vpack.c.b16 %v1861, %v1857
        %v2146 = vpack.c.b16 %v1862, %v1858
        %v2147 = vpack.c.b16 %v1867, %v1863
        %v2148 = vpack.c.b16 %v1868, %v1864
        %v2149 = vpack.c.b16 %v1869, %v1865
        %v2150 = vpack.c.b16 %v1870, %v1866
        %v2151 = vpack.c.b16 %v1875, %v1871
        %v2152 = vpack.c.b16 %v1876, %v1872
        %v2153 = vpack.c.b16 %v1877, %v1873
        %v2154 = vpack.c.b16 %v1878, %v1874
        %v2155 = vpack.c.b16 %v1883, %v1879
        %v2156 = vpack.c.b16 %v1884, %v1880
        %v2157 = vpack.c.b16 %v1885, %v1881
        %v2158 = vpack.c.b16 %v1886, %v1882
        %v2159 = vpack.c.b16 %v1891, %v1887
        %v2160 = vpack.c.b16 %v1892, %v1888
        %v2161 = vpack.c.b16 %v1893, %v1889
        %v2162 = vpack.c.b16 %v1894, %v1890
        %v2163 = vpack.c.b16 %v1899, %v1895
        %v2164 = vpack.c.b16 %v1900, %v1896
        %v2165 = vpack.c.b16 %v1901, %v1897
        %v2166 = vpack.c.b16 %v1902, %v1898
        %v2167 = vpack.c.b16 %v1907, %v1903
        %v2168 = vpack.c.b16 %v1908, %v1904
        %v2169 = vpack.c.b16 %v1909, %v1905
        %v2170 = vpack.c.b16 %v1910, %v1906
        %v2171 = vpack.c.b16 %v1915, %v1911
        %v2172 = vpack.c.b16 %v1916, %v1912
        %v2173 = vpack.c.b16 %v1917, %v1913
        %v2174 = vpack.c.b16 %v1918, %v1914
        %2431 = vmatpush.bf16.msra.mxu0 %v1947
        %2432 = vmatpush.bf16.msra.mxu0 %v1943
        %2433 = vmatpush.bf16.msra.mxu0 %v1939
        %2434 = vmatpush.bf16.msra.mxu0 %v1935
        %2435 = vmatpush.bf16.msra.mxu0 %v1931
        %2436 = vmatpush.bf16.msra.mxu0 %v1927
        %2437 = vmatpush.bf16.msra.mxu0 %v1923
        %2438 = vmatpush.bf16.msra.mxu0 %v1919
        %2439 = vmatmul.bf16.gmra.mxu0 %v877
        %v2440 = vpop.f32.mrf.mxu0
        %v2441 = vadd.f32 %v1143, %v2440
        %v2442 = vpop.f32.mrf.mxu0
        %2443 = vdwg.mxu0
        %2444 = vmatpush.bf16.msra.mxu0 %v1979
        %2445 = vmatpush.bf16.msra.mxu0 %v1975
        %2446 = vmatpush.bf16.msra.mxu0 %v1971
        %2447 = vmatpush.bf16.msra.mxu0 %v1967
        %2448 = vmatpush.bf16.msra.mxu0 %v1963
        %2449 = vmatpush.bf16.msra.mxu0 %v1959
        %2450 = vmatpush.bf16.msra.mxu0 %v1955
        %2451 = vmatpush.bf16.msra.mxu0 %v1951
        %2452 = vmatmul.bf16.gmra.mxu0 %v878
        %v2453 = vpop.f32.mrf.mxu0
        %v2454 = vadd.f32 %v2441, %v2453
        %v2455 = vpop.f32.mrf.mxu0
        %2456 = vdwg.mxu0
        %2457 = vmatpush.bf16.msra.mxu0 %v2011
        %2458 = vmatpush.bf16.msra.mxu0 %v2007
        %2459 = vmatpush.bf16.msra.mxu0 %v2003
        %2460 = vmatpush.bf16.msra.mxu0 %v1999
        %2461 = vmatpush.bf16.msra.mxu0 %v1995
        %2462 = vmatpush.bf16.msra.mxu0 %v1991
        %2463 = vmatpush.bf16.msra.mxu0 %v1987
        %2464 = vmatpush.bf16.msra.mxu0 %v1983
        %2465 = vmatmul.bf16.gmra.mxu0 %v879
        %v2466 = vpop.f32.mrf.mxu0
        %v2467 = vadd.f32 %v2454, %v2466
        %v2468 = vpop.f32.mrf.mxu0
        %2469 = vdwg.mxu0
        %2470 = vmatpush.bf16.msra.mxu0 %v2043
        %2471 = vmatpush.bf16.msra.mxu0 %v2039
        %2472 = vmatpush.bf16.msra.mxu0 %v2035
        %2473 = vmatpush.bf16.msra.mxu0 %v2031
        %2474 = vmatpush.bf16.msra.mxu0 %v2027
        %2475 = vmatpush.bf16.msra.mxu0 %v2023
        %2476 = vmatpush.bf16.msra.mxu0 %v2019
        %2477 = vmatpush.bf16.msra.mxu0 %v2015
        %2478 = vmatmul.bf16.gmra.mxu0 %v880
        %v2479 = vpop.f32.mrf.mxu0
        %v2480 = vadd.f32 %v2467, %v2479
        %v2481 = vpop.f32.mrf.mxu0
        %2482 = vdwg.mxu0
        %2483 = vmatpush.bf16.msra.mxu0 %v2075
        %2484 = vmatpush.bf16.msra.mxu0 %v2071
        %2485 = vmatpush.bf16.msra.mxu0 %v2067
        %2486 = vmatpush.bf16.msra.mxu0 %v2063
        %2487 = vmatpush.bf16.msra.mxu0 %v2059
        %2488 = vmatpush.bf16.msra.mxu0 %v2055
        %2489 = vmatpush.bf16.msra.mxu0 %v2051
        %2490 = vmatpush.bf16.msra.mxu0 %v2047
        %2491 = vmatmul.bf16.gmra.mxu0 %v881
        %v2492 = vpop.f32.mrf.mxu0
        %v2493 = vadd.f32 %v2480, %v2492
        %v2494 = vpop.f32.mrf.mxu0
        %2495 = vdwg.mxu0
        %2496 = vmatpush.bf16.msra.mxu0 %v2107
        %2497 = vmatpush.bf16.msra.mxu0 %v2103
        %2498 = vmatpush.bf16.msra.mxu0 %v2099
        %2499 = vmatpush.bf16.msra.mxu0 %v2095
        %2500 = vmatpush.bf16.msra.mxu0 %v2091
        %2501 = vmatpush.bf16.msra.mxu0 %v2087
        %2502 = vmatpush.bf16.msra.mxu0 %v2083
        %2503 = vmatpush.bf16.msra.mxu0 %v2079
        %2504 = vmatmul.bf16.gmra.mxu0 %v882
        %v2505 = vpop.f32.mrf.mxu0
        %v2506 = vadd.f32 %v2493, %v2505
        %v2507 = vpop.f32.mrf.mxu0
        %2508 = vdwg.mxu0
        %2509 = vmatpush.bf16.msra.mxu0 %v2139
        %2510 = vmatpush.bf16.msra.mxu0 %v2135
        %2511 = vmatpush.bf16.msra.mxu0 %v2131
        %2512 = vmatpush.bf16.msra.mxu0 %v2127
        %2513 = vmatpush.bf16.msra.mxu0 %v2123
        %2514 = vmatpush.bf16.msra.mxu0 %v2119
        %2515 = vmatpush.bf16.msra.mxu0 %v2115
        %2516 = vmatpush.bf16.msra.mxu0 %v2111
        %2517 = vmatmul.bf16.gmra.mxu0 %v883
        %v2518 = vpop.f32.mrf.mxu0
        %v2519 = vadd.f32 %v2506, %v2518
        %v2520 = vpop.f32.mrf.mxu0
        %2521 = vdwg.mxu0
        %2522 = vmatpush.bf16.msra.mxu0 %v2171
        %2523 = vmatpush.bf16.msra.mxu0 %v2167
        %2524 = vmatpush.bf16.msra.mxu0 %v2163
        %2525 = vmatpush.bf16.msra.mxu0 %v2159
        %2526 = vmatpush.bf16.msra.mxu0 %v2155
        %2527 = vmatpush.bf16.msra.mxu0 %v2151
        %2528 = vmatpush.bf16.msra.mxu0 %v2147
        %2529 = vmatpush.bf16.msra.mxu0 %v2143
        %2530 = vmatmul.bf16.gmra.mxu0 %v884
        %v2531 = vpop.f32.mrf.mxu0
        %v2532 = vadd.f32 %v2519, %v2531
        %v2533 = vpop.f32.mrf.mxu0
        %2534 = vdwg.mxu0
        %2535 = vmatpush.bf16.msra.mxu0 %v1948
        %2536 = vmatpush.bf16.msra.mxu0 %v1944
        %2537 = vmatpush.bf16.msra.mxu0 %v1940
        %2538 = vmatpush.bf16.msra.mxu0 %v1936
        %2539 = vmatpush.bf16.msra.mxu0 %v1932
        %2540 = vmatpush.bf16.msra.mxu0 %v1928
        %2541 = vmatpush.bf16.msra.mxu0 %v1924
        %2542 = vmatpush.bf16.msra.mxu0 %v1920
        %2543 = vmatmul.bf16.gmra.mxu0 %v877
        %v2544 = vpop.f32.mrf.mxu0
        %v2545 = vadd.f32 %v1144, %v2544
        %v2546 = vpop.f32.mrf.mxu0
        %2547 = vdwg.mxu0
        %2548 = vmatpush.bf16.msra.mxu0 %v1980
        %2549 = vmatpush.bf16.msra.mxu0 %v1976
        %2550 = vmatpush.bf16.msra.mxu0 %v1972
        %2551 = vmatpush.bf16.msra.mxu0 %v1968
        %2552 = vmatpush.bf16.msra.mxu0 %v1964
        %2553 = vmatpush.bf16.msra.mxu0 %v1960
        %2554 = vmatpush.bf16.msra.mxu0 %v1956
        %2555 = vmatpush.bf16.msra.mxu0 %v1952
        %2556 = vmatmul.bf16.gmra.mxu0 %v878
        %v2557 = vpop.f32.mrf.mxu0
        %v2558 = vadd.f32 %v2545, %v2557
        %v2559 = vpop.f32.mrf.mxu0
        %2560 = vdwg.mxu0
        %2561 = vmatpush.bf16.msra.mxu0 %v2012
        %2562 = vmatpush.bf16.msra.mxu0 %v2008
        %2563 = vmatpush.bf16.msra.mxu0 %v2004
        %2564 = vmatpush.bf16.msra.mxu0 %v2000
        %2565 = vmatpush.bf16.msra.mxu0 %v1996
        %2566 = vmatpush.bf16.msra.mxu0 %v1992
        %2567 = vmatpush.bf16.msra.mxu0 %v1988
        %2568 = vmatpush.bf16.msra.mxu0 %v1984
        %2569 = vmatmul.bf16.gmra.mxu0 %v879
        %v2570 = vpop.f32.mrf.mxu0
        %v2571 = vadd.f32 %v2558, %v2570
        %v2572 = vpop.f32.mrf.mxu0
        %2573 = vdwg.mxu0
        %2574 = vmatpush.bf16.msra.mxu0 %v2044
        %2575 = vmatpush.bf16.msra.mxu0 %v2040
        %2576 = vmatpush.bf16.msra.mxu0 %v2036
        %2577 = vmatpush.bf16.msra.mxu0 %v2032
        %2578 = vmatpush.bf16.msra.mxu0 %v2028
        %2579 = vmatpush.bf16.msra.mxu0 %v2024
        %2580 = vmatpush.bf16.msra.mxu0 %v2020
        %2581 = vmatpush.bf16.msra.mxu0 %v2016
        %2582 = vmatmul.bf16.gmra.mxu0 %v880
        %v2583 = vpop.f32.mrf.mxu0
        %v2584 = vadd.f32 %v2571, %v2583
        %v2585 = vpop.f32.mrf.mxu0
        %2586 = vdwg.mxu0
        %2587 = vmatpush.bf16.msra.mxu0 %v2076
        %2588 = vmatpush.bf16.msra.mxu0 %v2072
        %2589 = vmatpush.bf16.msra.mxu0 %v2068
        %2590 = vmatpush.bf16.msra.mxu0 %v2064
        %2591 = vmatpush.bf16.msra.mxu0 %v2060
        %2592 = vmatpush.bf16.msra.mxu0 %v2056
        %2593 = vmatpush.bf16.msra.mxu0 %v2052
        %2594 = vmatpush.bf16.msra.mxu0 %v2048
        %2595 = vmatmul.bf16.gmra.mxu0 %v881
        %v2596 = vpop.f32.mrf.mxu0
        %v2597 = vadd.f32 %v2584, %v2596
        %v2598 = vpop.f32.mrf.mxu0
        %2599 = vdwg.mxu0
        %2600 = vmatpush.bf16.msra.mxu0 %v2108
        %2601 = vmatpush.bf16.msra.mxu0 %v2104
        %2602 = vmatpush.bf16.msra.mxu0 %v2100
        %2603 = vmatpush.bf16.msra.mxu0 %v2096
        %2604 = vmatpush.bf16.msra.mxu0 %v2092
        %2605 = vmatpush.bf16.msra.mxu0 %v2088
        %2606 = vmatpush.bf16.msra.mxu0 %v2084
        %2607 = vmatpush.bf16.msra.mxu0 %v2080
        %2608 = vmatmul.bf16.gmra.mxu0 %v882
        %v2609 = vpop.f32.mrf.mxu0
        %v2610 = vadd.f32 %v2597, %v2609
        %v2611 = vpop.f32.mrf.mxu0
        %2612 = vdwg.mxu0
        %2613 = vmatpush.bf16.msra.mxu0 %v2140
        %2614 = vmatpush.bf16.msra.mxu0 %v2136
        %2615 = vmatpush.bf16.msra.mxu0 %v2132
        %2616 = vmatpush.bf16.msra.mxu0 %v2128
        %2617 = vmatpush.bf16.msra.mxu0 %v2124
        %2618 = vmatpush.bf16.msra.mxu0 %v2120
        %2619 = vmatpush.bf16.msra.mxu0 %v2116
        %2620 = vmatpush.bf16.msra.mxu0 %v2112
        %2621 = vmatmul.bf16.gmra.mxu0 %v883
        %v2622 = vpop.f32.mrf.mxu0
        %v2623 = vadd.f32 %v2610, %v2622
        %v2624 = vpop.f32.mrf.mxu0
        %2625 = vdwg.mxu0
        %2626 = vmatpush.bf16.msra.mxu0 %v2172
        %2627 = vmatpush.bf16.msra.mxu0 %v2168
        %2628 = vmatpush.bf16.msra.mxu0 %v2164
        %2629 = vmatpush.bf16.msra.mxu0 %v2160
        %2630 = vmatpush.bf16.msra.mxu0 %v2156
        %2631 = vmatpush.bf16.msra.mxu0 %v2152
        %2632 = vmatpush.bf16.msra.mxu0 %v2148
        %2633 = vmatpush.bf16.msra.mxu0 %v2144
        %2634 = vmatmul.bf16.gmra.mxu0 %v884
        %v2635 = vpop.f32.mrf.mxu0
        %v2636 = vadd.f32 %v2623, %v2635
        %v2637 = vpop.f32.mrf.mxu0
        %2638 = vdwg.mxu0
        %2639 = vmatpush.bf16.msra.mxu0 %v1949
        %2640 = vmatpush.bf16.msra.mxu0 %v1945
        %2641 = vmatpush.bf16.msra.mxu0 %v1941
        %2642 = vmatpush.bf16.msra.mxu0 %v1937
        %2643 = vmatpush.bf16.msra.mxu0 %v1933
        %2644 = vmatpush.bf16.msra.mxu0 %v1929
        %2645 = vmatpush.bf16.msra.mxu0 %v1925
        %2646 = vmatpush.bf16.msra.mxu0 %v1921
        %2647 = vmatmul.bf16.gmra.mxu0 %v877
        %v2648 = vpop.f32.mrf.mxu0
        %v2649 = vadd.f32 %v1145, %v2648
        %v2650 = vpop.f32.mrf.mxu0
        %2651 = vdwg.mxu0
        %2652 = vmatpush.bf16.msra.mxu0 %v1981
        %2653 = vmatpush.bf16.msra.mxu0 %v1977
        %2654 = vmatpush.bf16.msra.mxu0 %v1973
        %2655 = vmatpush.bf16.msra.mxu0 %v1969
        %2656 = vmatpush.bf16.msra.mxu0 %v1965
        %2657 = vmatpush.bf16.msra.mxu0 %v1961
        %2658 = vmatpush.bf16.msra.mxu0 %v1957
        %2659 = vmatpush.bf16.msra.mxu0 %v1953
        %2660 = vmatmul.bf16.gmra.mxu0 %v878
        %v2661 = vpop.f32.mrf.mxu0
        %v2662 = vadd.f32 %v2649, %v2661
        %v2663 = vpop.f32.mrf.mxu0
        %2664 = vdwg.mxu0
        %2665 = vmatpush.bf16.msra.mxu0 %v2013
        %2666 = vmatpush.bf16.msra.mxu0 %v2009
        %2667 = vmatpush.bf16.msra.mxu0 %v2005
        %2668 = vmatpush.bf16.msra.mxu0 %v2001
        %2669 = vmatpush.bf16.msra.mxu0 %v1997
        %2670 = vmatpush.bf16.msra.mxu0 %v1993
        %2671 = vmatpush.bf16.msra.mxu0 %v1989
        %2672 = vmatpush.bf16.msra.mxu0 %v1985
        %2673 = vmatmul.bf16.gmra.mxu0 %v879
        %v2674 = vpop.f32.mrf.mxu0
        %v2675 = vadd.f32 %v2662, %v2674
        %v2676 = vpop.f32.mrf.mxu0
        %2677 = vdwg.mxu0
        %2678 = vmatpush.bf16.msra.mxu0 %v2045
        %2679 = vmatpush.bf16.msra.mxu0 %v2041
        %2680 = vmatpush.bf16.msra.mxu0 %v2037
        %2681 = vmatpush.bf16.msra.mxu0 %v2033
        %2682 = vmatpush.bf16.msra.mxu0 %v2029
        %2683 = vmatpush.bf16.msra.mxu0 %v2025
        %2684 = vmatpush.bf16.msra.mxu0 %v2021
        %2685 = vmatpush.bf16.msra.mxu0 %v2017
        %2686 = vmatmul.bf16.gmra.mxu0 %v880
        %v2687 = vpop.f32.mrf.mxu0
        %v2688 = vadd.f32 %v2675, %v2687
        %v2689 = vpop.f32.mrf.mxu0
        %2690 = vdwg.mxu0
        %2691 = vmatpush.bf16.msra.mxu0 %v2077
        %2692 = vmatpush.bf16.msra.mxu0 %v2073
        %2693 = vmatpush.bf16.msra.mxu0 %v2069
        %2694 = vmatpush.bf16.msra.mxu0 %v2065
        %2695 = vmatpush.bf16.msra.mxu0 %v2061
        %2696 = vmatpush.bf16.msra.mxu0 %v2057
        %2697 = vmatpush.bf16.msra.mxu0 %v2053
        %2698 = vmatpush.bf16.msra.mxu0 %v2049
        %2699 = vmatmul.bf16.gmra.mxu0 %v881
        %v2700 = vpop.f32.mrf.mxu0
        %v2701 = vadd.f32 %v2688, %v2700
        %v2702 = vpop.f32.mrf.mxu0
        %2703 = vdwg.mxu0
        %2704 = vmatpush.bf16.msra.mxu0 %v2109
        %2705 = vmatpush.bf16.msra.mxu0 %v2105
        %2706 = vmatpush.bf16.msra.mxu0 %v2101
        %2707 = vmatpush.bf16.msra.mxu0 %v2097
        %2708 = vmatpush.bf16.msra.mxu0 %v2093
        %2709 = vmatpush.bf16.msra.mxu0 %v2089
        %2710 = vmatpush.bf16.msra.mxu0 %v2085
        %2711 = vmatpush.bf16.msra.mxu0 %v2081
        %2712 = vmatmul.bf16.gmra.mxu0 %v882
        %v2713 = vpop.f32.mrf.mxu0
        %v2714 = vadd.f32 %v2701, %v2713
        %v2715 = vpop.f32.mrf.mxu0
        %2716 = vdwg.mxu0
        %2717 = vmatpush.bf16.msra.mxu0 %v2141
        %2718 = vmatpush.bf16.msra.mxu0 %v2137
        %2719 = vmatpush.bf16.msra.mxu0 %v2133
        %2720 = vmatpush.bf16.msra.mxu0 %v2129
        %2721 = vmatpush.bf16.msra.mxu0 %v2125
        %2722 = vmatpush.bf16.msra.mxu0 %v2121
        %2723 = vmatpush.bf16.msra.mxu0 %v2117
        %2724 = vmatpush.bf16.msra.mxu0 %v2113
        %2725 = vmatmul.bf16.gmra.mxu0 %v883
        %v2726 = vpop.f32.mrf.mxu0
        %v2727 = vadd.f32 %v2714, %v2726
        %v2728 = vpop.f32.mrf.mxu0
        %2729 = vdwg.mxu0
        %2730 = vmatpush.bf16.msra.mxu0 %v2173
        %2731 = vmatpush.bf16.msra.mxu0 %v2169
        %2732 = vmatpush.bf16.msra.mxu0 %v2165
        %2733 = vmatpush.bf16.msra.mxu0 %v2161
        %2734 = vmatpush.bf16.msra.mxu0 %v2157
        %2735 = vmatpush.bf16.msra.mxu0 %v2153
        %2736 = vmatpush.bf16.msra.mxu0 %v2149
        %2737 = vmatpush.bf16.msra.mxu0 %v2145
        %2738 = vmatmul.bf16.gmra.mxu0 %v884
        %v2739 = vpop.f32.mrf.mxu0
        %v2740 = vadd.f32 %v2727, %v2739
        %v2741 = vpop.f32.mrf.mxu0
        %2742 = vdwg.mxu0
        %2743 = vmatpush.bf16.msra.mxu0 %v1950
        %2744 = vmatpush.bf16.msra.mxu0 %v1946
        %2745 = vmatpush.bf16.msra.mxu0 %v1942
        %2746 = vmatpush.bf16.msra.mxu0 %v1938
        %2747 = vmatpush.bf16.msra.mxu0 %v1934
        %2748 = vmatpush.bf16.msra.mxu0 %v1930
        %2749 = vmatpush.bf16.msra.mxu0 %v1926
        %2750 = vmatpush.bf16.msra.mxu0 %v1922
        %2751 = vmatmul.bf16.gmra.mxu0 %v877
        %v2752 = vpop.f32.mrf.mxu0
        %v2753 = vadd.f32 %v1146, %v2752
        %v2754 = vpop.f32.mrf.mxu0
        %2755 = vdwg.mxu0
        %2756 = vmatpush.bf16.msra.mxu0 %v1982
        %2757 = vmatpush.bf16.msra.mxu0 %v1978
        %2758 = vmatpush.bf16.msra.mxu0 %v1974
        %2759 = vmatpush.bf16.msra.mxu0 %v1970
        %2760 = vmatpush.bf16.msra.mxu0 %v1966
        %2761 = vmatpush.bf16.msra.mxu0 %v1962
        %2762 = vmatpush.bf16.msra.mxu0 %v1958
        %2763 = vmatpush.bf16.msra.mxu0 %v1954
        %2764 = vmatmul.bf16.gmra.mxu0 %v878
        %v2765 = vpop.f32.mrf.mxu0
        %v2766 = vadd.f32 %v2753, %v2765
        %v2767 = vpop.f32.mrf.mxu0
        %2768 = vdwg.mxu0
        %2769 = vmatpush.bf16.msra.mxu0 %v2014
        %2770 = vmatpush.bf16.msra.mxu0 %v2010
        %2771 = vmatpush.bf16.msra.mxu0 %v2006
        %2772 = vmatpush.bf16.msra.mxu0 %v2002
        %2773 = vmatpush.bf16.msra.mxu0 %v1998
        %2774 = vmatpush.bf16.msra.mxu0 %v1994
        %2775 = vmatpush.bf16.msra.mxu0 %v1990
        %2776 = vmatpush.bf16.msra.mxu0 %v1986
        %2777 = vmatmul.bf16.gmra.mxu0 %v879
        %v2778 = vpop.f32.mrf.mxu0
        %v2779 = vadd.f32 %v2766, %v2778
        %v2780 = vpop.f32.mrf.mxu0
        %2781 = vdwg.mxu0
        %2782 = vmatpush.bf16.msra.mxu0 %v2046
        %2783 = vmatpush.bf16.msra.mxu0 %v2042
        %2784 = vmatpush.bf16.msra.mxu0 %v2038
        %2785 = vmatpush.bf16.msra.mxu0 %v2034
        %2786 = vmatpush.bf16.msra.mxu0 %v2030
        %2787 = vmatpush.bf16.msra.mxu0 %v2026
        %2788 = vmatpush.bf16.msra.mxu0 %v2022
        %2789 = vmatpush.bf16.msra.mxu0 %v2018
        %2790 = vmatmul.bf16.gmra.mxu0 %v880
        %v2791 = vpop.f32.mrf.mxu0
        %v2792 = vadd.f32 %v2779, %v2791
        %v2793 = vpop.f32.mrf.mxu0
        %2794 = vdwg.mxu0
        %2795 = vmatpush.bf16.msra.mxu0 %v2078
        %2796 = vmatpush.bf16.msra.mxu0 %v2074
        %2797 = vmatpush.bf16.msra.mxu0 %v2070
        %2798 = vmatpush.bf16.msra.mxu0 %v2066
        %2799 = vmatpush.bf16.msra.mxu0 %v2062
        %2800 = vmatpush.bf16.msra.mxu0 %v2058
        %2801 = vmatpush.bf16.msra.mxu0 %v2054
        %2802 = vmatpush.bf16.msra.mxu0 %v2050
        %2803 = vmatmul.bf16.gmra.mxu0 %v881
        %v2804 = vpop.f32.mrf.mxu0
        %v2805 = vadd.f32 %v2792, %v2804
        %v2806 = vpop.f32.mrf.mxu0
        %2807 = vdwg.mxu0
        %2808 = vmatpush.bf16.msra.mxu0 %v2110
        %2809 = vmatpush.bf16.msra.mxu0 %v2106
        %2810 = vmatpush.bf16.msra.mxu0 %v2102
        %2811 = vmatpush.bf16.msra.mxu0 %v2098
        %2812 = vmatpush.bf16.msra.mxu0 %v2094
        %2813 = vmatpush.bf16.msra.mxu0 %v2090
        %2814 = vmatpush.bf16.msra.mxu0 %v2086
        %2815 = vmatpush.bf16.msra.mxu0 %v2082
        %2816 = vmatmul.bf16.gmra.mxu0 %v882
        %v2817 = vpop.f32.mrf.mxu0
        %v2818 = vadd.f32 %v2805, %v2817
        %v2819 = vpop.f32.mrf.mxu0
        %2820 = vdwg.mxu0
        %2821 = vmatpush.bf16.msra.mxu0 %v2142
        %2822 = vmatpush.bf16.msra.mxu0 %v2138
        %2823 = vmatpush.bf16.msra.mxu0 %v2134
        %2824 = vmatpush.bf16.msra.mxu0 %v2130
        %2825 = vmatpush.bf16.msra.mxu0 %v2126
        %2826 = vmatpush.bf16.msra.mxu0 %v2122
        %2827 = vmatpush.bf16.msra.mxu0 %v2118
        %2828 = vmatpush.bf16.msra.mxu0 %v2114
        %2829 = vmatmul.bf16.gmra.mxu0 %v883
        %v2830 = vpop.f32.mrf.mxu0
        %v2831 = vadd.f32 %v2818, %v2830
        %v2832 = vpop.f32.mrf.mxu0
        %2833 = vdwg.mxu0
        %2834 = vmatpush.bf16.msra.mxu0 %v2174
        %2835 = vmatpush.bf16.msra.mxu0 %v2170
        %2836 = vmatpush.bf16.msra.mxu0 %v2166
        %2837 = vmatpush.bf16.msra.mxu0 %v2162
        %2838 = vmatpush.bf16.msra.mxu0 %v2158
        %2839 = vmatpush.bf16.msra.mxu0 %v2154
        %2840 = vmatpush.bf16.msra.mxu0 %v2150
        %2841 = vmatpush.bf16.msra.mxu0 %v2146
        %2842 = vmatmul.bf16.gmra.mxu0 %v884
        %v2843 = vpop.f32.mrf.mxu0
        %v2844 = vadd.f32 %v2831, %v2843
        %v2845 = vpop.f32.mrf.mxu0
        %2846 = vdwg.mxu0
        %s2847 = smul.u32 %s24, 512
        %s2848 = sshra.s32 %s2847, 7
        %s2849 = sand.u32 %s2847, 127
        %s2850 = smul.addr %s2848, 2
        %s2851 = scalar_lea.vmem [#allocation2], %s2850
        %v2852 = vld [vmem:[%s2851] sm:$0xff]
        %s2853 = smul.addr %s2848, 2
        %s2854 = scalar_lea.vmem [#allocation5], %s2853
        %v2855 = vld [vmem:[%s2854] sm:$0xff]
        %v2856 = vsub.f32 %v2852, %v2855
        %v2861 = vrot.slane %v2636, 6
        %v2862 = vrot.slane %v2740, 4
        %v2863 = vrot.slane %v2844, 2
        %v2864 = vsel %vm772, %v2532, %v2861
        %v2865 = vsel %vm774, %v2862, %v2863
        %v2866 = vsel %vm776, %v2864, %v2865
        %v2868 = vsub.f32 %v2856, %v2866
        %v2869 = vmul.f32 %v2868, %v2868
        %2871 = vst [vmem:[#allocation1] ss:$4 sm:$0xff] %v2869
        %v2872 = vld.sshfl [vmem:[#allocation1] sm:$0xff pattern:$0x73625140]
        %v2873 = vld.sshfl [vmem:[#allocation1 + $0x8] sm:$0xff pattern:$0x73625140]
        %v2874 = vld.sshfl [vmem:[#allocation1 + $0x10] sm:$0xff pattern:$0x73625140]
        %v2875 = vld.sshfl [vmem:[#allocation1 + $0x18] sm:$0xff pattern:$0x73625140]
        %v2880 = vsel %vm772, %v2872, 0.0
        %v2881 = vsel %vm772, %v2873, 0.0
        %v2882 = vadd.f32 %v2880, %v2881
        %v2883 = vsel %vm772, %v2874, 0.0
        %v2884 = vadd.f32 %v2882, %v2883
        %v2885 = vsel %vm772, %v2875, 0.0
        %v2886 = vadd.f32 %v2884, %v2885
        %2887 = vadd.xlane.f32.xlu0 %v2886
        %v2888 = vpop.xlane.xlu0 %2887
        %v2889 = vrot.slane %v2888, 4
        %v2890 = vadd.f32 %v2888, %v2889
        %v2891 = vrot.slane %v2890, 2
        %v2892 = vadd.f32 %v2890, %v2891
        %v2893 = vrot.slane %v2892, 1
        %v2894 = vadd.f32 %v2892, %v2893
        %s2895 = vtos %v2894
        %v2896 = vlaneseq
        %v2897 = vand.u32 %v2896, 127
        %vm2898 = vcmp.eq.s32.totalorder %v2897, 0
        %v2899 = vstv %s2895
        %v2900 = vsel %vm2898, %v2899, 0.0
        %2901 = vst [vmem:[%s389] sm:$0x1] %v2900
        %s2902 = sand.u32 %s189, 1
        %s2903 = scalar_lea.sflag [#allocation4], %s2902
        %s2904 = sand.u32 %s189, 1
        %s2905 = scalar_lea.vmem [#allocation12], %s2904
        // Predicated region
        $region73: #{tpu_custom_call.1} parent=47 // pred_check
          %p2906 = pneg %p199
        $region74: #{tpu_custom_call.1} parent=47 // pred_check_branch
          %2908 = sbr.rel (%p2906) target = $region76
        $region75: #{tpu_custom_call.1} parent=47 // pred_region
          %2910 = vsyncadd %s2903, 0
          %s2911 = scalar_lea.hbm %s7, %s24
          %s2913 = sshll.u32 %s2905, 4
          %s2914 = int_to_ptr.vmem [resolvable:$true] %s2913
          %s2915 = sshll.u32 %s2911, 4
          %s2916 = int_to_ptr.hbm [resolvable:$true] %s2915
          %2918 = dma.vmem_to_hbm [thread:$0]  %s2914, 16, %s2916, %s2903
        $region76: #{tpu_custom_call.1} parent=47 // pred_fallthru
          _
      $region48: #{tpu_custom_call.1} parent=5 // pred_fallthru
        _
      %p2919 = scmp.le.s32.totalorder 2, %s19
      // Predicated region
      $region77: #{tpu_custom_call.1} parent=5 // pred_check
        %p2920 = pneg %p2919
      $region78: #{tpu_custom_call.1} parent=5 // pred_check_branch
        %2922 = sbr.rel (%p2920) target = $region80
      $region79: #{tpu_custom_call.1} parent=5 // pred_region
        %s2923 = ssub.s32 %s19, 2
        // Predicated region
        $region81: #{tpu_custom_call.1} parent=79 // pred_check
          %p2924 = pneg %p205
        $region82: #{tpu_custom_call.1} parent=79 // pred_check_branch
          %2926 = sbr.rel (%p2924) target = $region84
        $region83: #{tpu_custom_call.1} parent=79 // pred_region
          %s2927 = sand.u32 %s190, 1
          %s2928 = scalar_lea.sflag [#allocation4], %s2927
          %s2929 = sand.u32 %s190, 1
          %s2930 = scalar_lea.vmem [#allocation12], %s2929
          %2932 = dma.done %s2928, 16
        $region84: #{tpu_custom_call.1} parent=79 // pred_fallthru
          _
      $region80: #{tpu_custom_call.1} parent=5 // pred_fallthru
        _
    $region6: #{tpu_custom_call.1} parent=1 // loop_footer
      %s23 = sadd.s32 1, %s19
    $region7: #{tpu_custom_call.1} parent=1 // loop_footer_branch
      %18 = sbr.rel target = $region3
    $region8: #{tpu_custom_call.1} parent=1 // loop_exit
      _
    %2933 = vsyncpa [#allocation3], 1
    %s2934 = scalar_lea.sflag [#allocation3], 1
    %2935 = vsyncpa %s2934, 1
    %2936 = vsyncpa [#allocation6], 1
    %2937 = vsyncpa [#allocation9], 1
    %2938 = vsyncpa [#allocation4], 1
    %s2939 = scalar_lea.sflag [#allocation4], 1
    %2940 = vsyncpa %s2939, 1

</llo_original>
